<compile_context>
chip_gen: v7x
topology: tpu7x:2x2x1
jax: 0.10.0
libtpu: 0.0.40
codegen_flags: <defaults>
</compile_context>

<pallas_src>
import math
from functools import partial

import jax
import jax.numpy as jnp
import numpy as np
from jax.experimental import pallas as pl
from jax.experimental.pallas import tpu as pltpu


# ---------------------------------------------------------------------------
# Kernel (one grid step = one (batch element, layer) pair)
# ---------------------------------------------------------------------------
def _layer_norm(x, w, b, eps=1e-5):
    mu = jnp.mean(x, axis=-1, keepdims=True)
    var = jnp.mean((x - mu) ** 2, axis=-1, keepdims=True)   # biased var, like PyTorch
    return (x - mu) * jax.lax.rsqrt(var + eps) * w + b


def vit_layer_kernel(x_ref, wqkv_ref, wo_ref, w1_ref, w2_ref, vecs_ref,
                     o_ref, act_ref, *, nhead, matmul_dtype):
    S, D = act_ref.shape
    H = nhead
    hd = D // H
    ffd = w1_ref.shape[1]
    l = pl.program_id(1)

    # Layer 0: load this sample's activations into the VMEM-resident scratch.
    @pl.when(l == 0)
    def _():
        act_ref[...] = x_ref[...].astype(jnp.float32)

    x = act_ref[...]                                   # (S, D) f32
    x_mm = x.astype(matmul_dtype)

    wqkv = wqkv_ref[...]                               # (D, 3D)  (q-scale pre-folded)
    wo = wo_ref[...]                                   # (D, D)
    w1 = w1_ref[...]                                   # (D, FFD)
    w2 = w2_ref[...]                                   # (FFD, D)
    vecs = vecs_ref[...].astype(jnp.float32)           # (8, W)
    bqkv = vecs[0:1, :3 * D]
    bo = vecs[1:2, :D]
    b1 = vecs[2:3, :ffd]
    b2 = vecs[3:4, :D]
    ln1w, ln1b = vecs[4:5, :D], vecs[5:6, :D]
    ln2w, ln2b = vecs[6:7, :D], vecs[7:8, :D]

    # ---- combined QKV projection: single lane-dense (S,D)x(D,3D) matmul ----
    qkv = jnp.dot(x_mm, wqkv, preferred_element_type=jnp.float32) + bqkv   # (S, 3D)

    # ---- per-head attention (scale already folded into the q projection) ---
    ctx_parts = []
    for h in range(H):
        q_h = qkv[:, h * hd:(h + 1) * hd].astype(matmul_dtype)             # (S, hd)
        k_h = qkv[:, D + h * hd:D + (h + 1) * hd].astype(matmul_dtype)     # (S, hd)
        v_h = qkv[:, 2 * D + h * hd:2 * D + (h + 1) * hd].astype(matmul_dtype)
        s = jax.lax.dot_general(q_h, k_h, (((1,), (1,)), ((), ())),
                                preferred_element_type=jnp.float32)        # (S, S)
        s = s - jnp.max(s, axis=-1, keepdims=True)
        p = jnp.exp(s)
        p = p * pl.reciprocal(jnp.sum(p, axis=-1, keepdims=True), approx=False)
        ctx_parts.append(jnp.dot(p.astype(matmul_dtype), v_h,
                                 preferred_element_type=jnp.float32))      # (S, hd)
    ctx = jnp.concatenate(ctx_parts, axis=-1)                              # (S, D)

    # ---- output projection: head-sum fused into one D-deep MXU matmul ------
    attn = jnp.dot(ctx.astype(matmul_dtype), wo,
                   preferred_element_type=jnp.float32) + bo                # (S, D)

    # ---- residual + LayerNorm 1 (post-norm) --------------------------------
    h1 = _layer_norm(x + attn, ln1w, ln1b)

    # ---- feed-forward (ReLU) ------------------------------------------------
    ff = jnp.dot(h1.astype(matmul_dtype), w1,
                 preferred_element_type=jnp.float32) + b1
    ff = jnp.maximum(ff, 0.0)
    ff = jnp.dot(ff.astype(matmul_dtype), w2,
                 preferred_element_type=jnp.float32) + b2

    # ---- residual + LayerNorm 2 ---------------------------------------------
    out = _layer_norm(h1 + ff, ln2w, ln2b)
    act_ref[...] = out

    # Last layer: the only HBM activation write (lane-dense (S, D) tile).
    @pl.when(l == pl.num_programs(1) - 1)
    def _():
        o_ref[...] = out.astype(o_ref.dtype)


# ---------------------------------------------------------------------------
# Wrapper: one pallas_call, grid = (batch, layer)
# ---------------------------------------------------------------------------
def vision_transformer(x, packed, nhead):
    B, S, D = x.shape
    L, _, FFD = packed["w1"].shape
    H = nhead
    hd = D // H
    W = packed["vecs"].shape[2]
    matmul_dtype = packed["wqkv"].dtype

    flops = 2 * L * B * (S * D * 3 * D + 2 * H * S * S * hd + S * D * D
                         + 2 * S * D * FFD)
    transcendentals = L * B * H * S * S
    weight_bytes = sum(int(np.prod(packed[k].shape)) * packed[k].dtype.itemsize
                       for k in ("wqkv", "wo", "w1", "w2", "vecs"))
    bytes_accessed = int(2 * x.size * x.dtype.itemsize + B * weight_bytes)

    kernel = partial(vit_layer_kernel, nhead=nhead, matmul_dtype=matmul_dtype)

    out = pl.pallas_call(
        kernel,
        out_shape=jax.ShapeDtypeStruct((B, S, D), x.dtype),
        grid_spec=pltpu.PrefetchScalarGridSpec(
            num_scalar_prefetch=0,
            grid=(B, L),
            in_specs=[
                pl.BlockSpec((None, S, D), lambda b, l: (b, 0, 0)),        # x
                pl.BlockSpec((None, D, 3 * D), lambda b, l: (l, 0, 0)),    # wqkv
                pl.BlockSpec((None, D, D), lambda b, l: (l, 0, 0)),        # wo
                pl.BlockSpec((None, D, FFD), lambda b, l: (l, 0, 0)),      # w1
                pl.BlockSpec((None, FFD, D), lambda b, l: (l, 0, 0)),      # w2
                pl.BlockSpec((None, 8, W), lambda b, l: (l, 0, 0)),        # vecs
            ],
            out_specs=pl.BlockSpec((None, S, D), lambda b, l: (b, 0, 0)),
            scratch_shapes=[pltpu.VMEM((S, D), jnp.float32)],              # resident act
        ),
        compiler_params=pltpu.CompilerParams(
            dimension_semantics=("parallel", "arbitrary"),
            vmem_limit_bytes=64 * 1024 * 1024),
        cost_estimate=pl.CostEstimate(flops=flops,
                                      transcendentals=transcendentals,
                                      bytes_accessed=bytes_accessed),
    )(x, packed["wqkv"], packed["wo"], packed["w1"], packed["w2"],
      packed["vecs"])
    return out


# ---------------------------------------------------------------------------
# Host-side parameter packing: stack over layers, fold softmax scale into the
# q projection, pre-cast matmul weights (bf16 by default), pack all small
# vectors into one (L, 8, W) array.
# ---------------------------------------------------------------------------
def pack_params(layer_params, nhead, matmul_dtype=jnp.bfloat16):
    D = layer_params[0]["wqkv"].shape[0]
    FFD = layer_params[0]["w1"].shape[1]
    hd = D // nhead
    scale = 1.0 / math.sqrt(hd)
    W = max(3 * D, FFD, D)

    def padW(v):
        v = v.reshape(-1)
        return jnp.pad(v, (0, W - v.shape[0]))

    wqkvs, wos, w1s, w2s, vecss = [], [], [], [], []
    for p in layer_params:
        wqkv = p["wqkv"]                                    # (D, 3D): qkv = x @ wqkv
        wqkv = jnp.concatenate([wqkv[:, :D] * scale, wqkv[:, D:]], axis=1)
        bqkv = p["bqkv"].reshape(-1)
        bqkv = jnp.concatenate([bqkv[:D] * scale, bqkv[D:]])
        wqkvs.append(wqkv.astype(matmul_dtype))
        wos.append(p["wo"].astype(matmul_dtype))
        w1s.append(p["w1"].astype(matmul_dtype))
        w2s.append(p["w2"].astype(matmul_dtype))
        vecss.append(jnp.stack(
            [padW(bqkv), padW(p["bo"]), padW(p["b1"]), padW(p["b2"]),
             padW(p["ln1w"]), padW(p["ln1b"]),
             padW(p["ln2w"]), padW(p["ln2b"])], axis=0).astype(jnp.float32))

    return dict(wqkv=jnp.stack(wqkvs), wo=jnp.stack(wos),
                w1=jnp.stack(w1s), w2=jnp.stack(w2s), vecs=jnp.stack(vecss))


# ---------------------------------------------------------------------------
# Deterministic parameter init (shapes follow nn.TransformerEncoderLayer).
# ---------------------------------------------------------------------------
def init_params(key, d_model, ffd, num_layers):
    def unif(k, shape, fan_in):
        bound = 1.0 / math.sqrt(fan_in)
        return jax.random.uniform(k, shape, jnp.float32, -bound, bound)

    layers = []
    for i in range(num_layers):
        ks = jax.random.split(jax.random.fold_in(key, i), 8)
        layers.append(dict(
            wqkv=unif(ks[0], (d_model, 3 * d_model), d_model),
            bqkv=unif(ks[1], (1, 3 * d_model), d_model),
            wo=unif(ks[2], (d_model, d_model), d_model),
            bo=unif(ks[3], (1, d_model), d_model),
            ln1w=jnp.ones((1, d_model), jnp.float32),
            ln1b=jnp.zeros((1, d_model), jnp.float32),
            w1=unif(ks[4], (d_model, ffd), d_model),
            b1=unif(ks[5], (1, ffd), d_model),
            w2=unif(ks[6], (ffd, d_model), ffd),
            b2=unif(ks[7], (1, d_model), ffd),
            ln2w=jnp.ones((1, d_model), jnp.float32),
            ln2b=jnp.zeros((1, d_model), jnp.float32),
        ))
    return layers


# ---------------------------------------------------------------------------
# Pure-JAX reference (same math, no Pallas) for the correctness check.
# ---------------------------------------------------------------------------
def reference_layer(x, p, nhead):
    B, S, D = x.shape
    hd = D // nhead
    qkv = x @ p["wqkv"] + p["bqkv"]
    q, k, v = qkv[..., :D], qkv[..., D:2 * D], qkv[..., 2 * D:]
    qh = q.reshape(B, S, nhead, hd).transpose(0, 2, 1, 3)
    kh = k.reshape(B, S, nhead, hd).transpose(0, 2, 1, 3)
    vh = v.reshape(B, S, nhead, hd).transpose(0, 2, 1, 3)
    s = (qh @ kh.transpose(0, 1, 3, 2)) / math.sqrt(hd)
    pattn = jax.nn.softmax(s, axis=-1)
    attn = (pattn @ vh).transpose(0, 2, 1, 3).reshape(B, S, D)
    attn = attn @ p["wo"] + p["bo"]

    def ln(z, w, b, eps=1e-5):
        mu = z.mean(-1, keepdims=True)
        var = ((z - mu) ** 2).mean(-1, keepdims=True)
        return (z - mu) / jnp.sqrt(var + eps) * w + b

    h1 = ln(x + attn, p["ln1w"], p["ln1b"])
    ff = jnp.maximum(h1 @ p["w1"] + p["b1"], 0.0) @ p["w2"] + p["b2"]
    return ln(h1 + ff, p["ln2w"], p["ln2b"])


def reference(x, layer_params, nhead):
    for p in layer_params:
        x = reference_layer(x, p, nhead)
    return x


if __name__ == "__main__":
    # Small shapes implied by the module: d_model(=patches)=32, ffd=64,
    # nhead=8, num_layers=2, batch=2, seq=8.
    B, S, D, FFD, NHEAD, NLAYERS = 2, 8, 32, 64, 8, 2

    key = jax.random.PRNGKey(0)
    kx, kp = jax.random.split(key)
    x = jax.random.normal(kx, (B, S, D), dtype=jnp.float32)
    params = init_params(kp, D, FFD, NLAYERS)

    ref = jax.block_until_ready(reference(x, params, NHEAD))

    # f32 matmul operands: tight correctness check against the reference.
    packed_f32 = pack_params(params, NHEAD, matmul_dtype=jnp.float32)
    out_f32 = jax.block_until_ready(vision_transformer(x, packed_f32, NHEAD))
    np.testing.assert_allclose(np.asarray(out_f32), np.asarray(ref),
                               rtol=1e-3, atol=1e-3)

    # bf16 matmul operands (default / MXU-rated path), f32 accumulation and
    # f32 LayerNorm / softmax / residual math.
    packed_bf16 = pack_params(params, NHEAD, matmul_dtype=jnp.bfloat16)
    out_bf16 = jax.block_until_ready(vision_transformer(x, packed_bf16, NHEAD))
    np.testing.assert_allclose(np.asarray(out_bf16), np.asarray(ref),
                               rtol=1e-1, atol=1e-1)

    print("KERNEL_OK")
</pallas_src>

<mosaic_0001>
module attributes {stable_mosaic.version = 11 : i64} {
  func.func @vit_layer_kernel(%arg0: i32, %arg1: i32, %arg2: memref<1x8x32xf32, #tpu.memory_space<vmem>>, %arg3: memref<1x32x96xf32, #tpu.memory_space<vmem>>, %arg4: memref<1x32x32xf32, #tpu.memory_space<vmem>>, %arg5: memref<1x32x64xf32, #tpu.memory_space<vmem>>, %arg6: memref<1x64x32xf32, #tpu.memory_space<vmem>>, %arg7: memref<1x8x96xf32, #tpu.memory_space<vmem>>, %arg8: memref<1x8x32xf32, #tpu.memory_space<vmem>>, %arg9: memref<8x32xf32, #tpu.memory_space<vmem>>) attributes {dimension_semantics = [#tpu.dimension_semantics<parallel>, #tpu.dimension_semantics<arbitrary>], iteration_bounds = array<i64: 2, 2>, scalar_prefetch = 0 : i64, scratch_operands = 1 : i64, tpu.core_type = #tpu.core_type<tc>, window_params = [{transform_indices = @transform_0, window_bounds = array<i64: 1, 8, 32>}, {transform_indices = @transform_1, window_bounds = array<i64: 1, 32, 96>}, {transform_indices = @transform_2, window_bounds = array<i64: 1, 32, 32>}, {transform_indices = @transform_3, window_bounds = array<i64: 1, 32, 64>}, {transform_indices = @transform_4, window_bounds = array<i64: 1, 64, 32>}, {transform_indices = @transform_5, window_bounds = array<i64: 1, 8, 96>}, {transform_indices = @transform_6, window_bounds = array<i64: 1, 8, 32>}]} {
    %c0_i32 = arith.constant 0 : i32
    %0 = arith.cmpi eq, %arg1, %c0_i32 : i32
    %1 = arith.extui %0 : i1 to i32
    %c0_i32_0 = arith.constant 0 : i32
    %2 = arith.cmpi ne, %1, %c0_i32_0 : i32
    scf.if %2 {
      %c0_66 = arith.constant 0 : index
      %c0_67 = arith.constant 0 : index
      %c0_68 = arith.constant 0 : index
      %207 = vector.load %arg2[%c0_66, %c0_67, %c0_68] : memref<1x8x32xf32, #tpu.memory_space<vmem>>, vector<1x8x32xf32>
      %208 = vector.shape_cast %207 : vector<1x8x32xf32> to vector<8x32xf32>
      %c0_69 = arith.constant 0 : index
      %c0_70 = arith.constant 0 : index
      %209 = vector.load %arg9[%c0_69, %c0_70] : memref<8x32xf32, #tpu.memory_space<vmem>>, vector<8x32xf32>
      tpu.vector_store %arg9[%c0_69, %c0_70], %208 {strides = array<i32>} : memref<8x32xf32, #tpu.memory_space<vmem>>, vector<8x32xf32>,
    } else {
    }
    %c0 = arith.constant 0 : index
    %c0_1 = arith.constant 0 : index
    %3 = vector.load %arg9[%c0, %c0_1] : memref<8x32xf32, #tpu.memory_space<vmem>>, vector<8x32xf32>
    %c0_2 = arith.constant 0 : index
    %c0_3 = arith.constant 0 : index
    %c0_4 = arith.constant 0 : index
    %4 = vector.load %arg3[%c0_2, %c0_3, %c0_4] : memref<1x32x96xf32, #tpu.memory_space<vmem>>, vector<1x32x96xf32>
    %5 = vector.shape_cast %4 : vector<1x32x96xf32> to vector<32x96xf32>
    %c0_5 = arith.constant 0 : index
    %c0_6 = arith.constant 0 : index
    %c0_7 = arith.constant 0 : index
    %6 = vector.load %arg4[%c0_5, %c0_6, %c0_7] : memref<1x32x32xf32, #tpu.memory_space<vmem>>, vector<1x32x32xf32>
    %7 = vector.shape_cast %6 : vector<1x32x32xf32> to vector<32x32xf32>
    %c0_8 = arith.constant 0 : index
    %c0_9 = arith.constant 0 : index
    %c0_10 = arith.constant 0 : index
    %8 = vector.load %arg5[%c0_8, %c0_9, %c0_10] : memref<1x32x64xf32, #tpu.memory_space<vmem>>, vector<1x32x64xf32>
    %9 = vector.shape_cast %8 : vector<1x32x64xf32> to vector<32x64xf32>
    %c0_11 = arith.constant 0 : index
    %c0_12 = arith.constant 0 : index
    %c0_13 = arith.constant 0 : index
    %10 = vector.load %arg6[%c0_11, %c0_12, %c0_13] : memref<1x64x32xf32, #tpu.memory_space<vmem>>, vector<1x64x32xf32>
    %11 = vector.shape_cast %10 : vector<1x64x32xf32> to vector<64x32xf32>
    %c0_14 = arith.constant 0 : index
    %c0_15 = arith.constant 0 : index
    %c0_16 = arith.constant 0 : index
    %12 = vector.load %arg7[%c0_14, %c0_15, %c0_16] : memref<1x8x96xf32, #tpu.memory_space<vmem>>, vector<1x8x96xf32>
    %13 = vector.shape_cast %12 : vector<1x8x96xf32> to vector<8x96xf32>
    %14 = vector.extract_strided_slice %13 {offsets = [0, 0], sizes = [1, 96], strides = [1, 1]} : vector<8x96xf32> to vector<1x96xf32>
    %15 = vector.extract_strided_slice %13 {offsets = [1, 0], sizes = [1, 32], strides = [1, 1]} : vector<8x96xf32> to vector<1x32xf32>
    %16 = vector.extract_strided_slice %13 {offsets = [2, 0], sizes = [1, 64], strides = [1, 1]} : vector<8x96xf32> to vector<1x64xf32>
    %17 = vector.extract_strided_slice %13 {offsets = [3, 0], sizes = [1, 32], strides = [1, 1]} : vector<8x96xf32> to vector<1x32xf32>
    %18 = vector.extract_strided_slice %13 {offsets = [4, 0], sizes = [1, 32], strides = [1, 1]} : vector<8x96xf32> to vector<1x32xf32>
    %19 = vector.extract_strided_slice %13 {offsets = [5, 0], sizes = [1, 32], strides = [1, 1]} : vector<8x96xf32> to vector<1x32xf32>
    %20 = vector.extract_strided_slice %13 {offsets = [6, 0], sizes = [1, 32], strides = [1, 1]} : vector<8x96xf32> to vector<1x32xf32>
    %21 = vector.extract_strided_slice %13 {offsets = [7, 0], sizes = [1, 32], strides = [1, 1]} : vector<8x96xf32> to vector<1x32xf32>
    %cst = arith.constant dense<0.000000e+00> : vector<8x96xf32>
    %22 = tpu.matmul %3, %5, %cst {dimension_numbers = #tpu.dot_dimension_numbers<[1], [0], [0], [1], [0, 0, 1, 1], [], []>} : vector<8x32xf32>, vector<32x96xf32>, vector<8x96xf32> -> vector<8x96xf32>
    %23 = vector.broadcast %14 : vector<1x96xf32> to vector<8x96xf32>
    %24 = arith.addf %22, %23 : vector<8x96xf32>
    %25 = vector.extract_strided_slice %24 {offsets = [0, 0], sizes = [8, 4], strides = [1, 1]} : vector<8x96xf32> to vector<8x4xf32>
    %26 = vector.extract_strided_slice %24 {offsets = [0, 32], sizes = [8, 4], strides = [1, 1]} : vector<8x96xf32> to vector<8x4xf32>
    %27 = vector.extract_strided_slice %24 {offsets = [0, 64], sizes = [8, 4], strides = [1, 1]} : vector<8x96xf32> to vector<8x4xf32>
    %cst_17 = arith.constant dense<0.000000e+00> : vector<8x8xf32>
    %28 = tpu.matmul %25, %26, %cst_17 {dimension_numbers = #tpu.dot_dimension_numbers<[1], [1], [0], [0], [0, 0, 1, 0], [], []>} : vector<8x4xf32>, vector<8x4xf32>, vector<8x8xf32> -> vector<8x8xf32>
    %cst_18 = arith.constant dense<0xFF800000> : vector<8xf32>
    %29 = vector.multi_reduction <maximumf>, %28, %cst_18 [1] : vector<8x8xf32> to vector<8xf32>
    %30 = vector.shape_cast %29 : vector<8xf32> to vector<8x1xf32>
    %31 = vector.broadcast %30 : vector<8x1xf32> to vector<8x8xf32>
    %32 = arith.subf %28, %31 : vector<8x8xf32>
    %33 = math.exp %32 : vector<8x8xf32>
    %cst_19 = arith.constant dense<0.000000e+00> : vector<8xf32>
    %34 = vector.multi_reduction <add>, %33, %cst_19 [1] : vector<8x8xf32> to vector<8xf32>
    %35 = vector.shape_cast %34 : vector<8xf32> to vector<8x1xf32>
    %36 = tpu.reciprocal %35 : vector<8x1xf32> -> vector<8x1xf32>
    %37 = vector.broadcast %36 : vector<8x1xf32> to vector<8x8xf32>
    %38 = arith.mulf %33, %37 : vector<8x8xf32>
    %cst_20 = arith.constant dense<0.000000e+00> : vector<8x4xf32>
    %39 = tpu.matmul %38, %27, %cst_20 {dimension_numbers = #tpu.dot_dimension_numbers<[1], [0], [0], [1], [0, 0, 1, 1], [], []>} : vector<8x8xf32>, vector<8x4xf32>, vector<8x4xf32> -> vector<8x4xf32>
    %40 = vector.extract_strided_slice %24 {offsets = [0, 4], sizes = [8, 4], strides = [1, 1]} : vector<8x96xf32> to vector<8x4xf32>
    %41 = vector.extract_strided_slice %24 {offsets = [0, 36], sizes = [8, 4], strides = [1, 1]} : vector<8x96xf32> to vector<8x4xf32>
    %42 = vector.extract_strided_slice %24 {offsets = [0, 68], sizes = [8, 4], strides = [1, 1]} : vector<8x96xf32> to vector<8x4xf32>
    %cst_21 = arith.constant dense<0.000000e+00> : vector<8x8xf32>
    %43 = tpu.matmul %40, %41, %cst_21 {dimension_numbers = #tpu.dot_dimension_numbers<[1], [1], [0], [0], [0, 0, 1, 0], [], []>} : vector<8x4xf32>, vector<8x4xf32>, vector<8x8xf32> -> vector<8x8xf32>
    %cst_22 = arith.constant dense<0xFF800000> : vector<8xf32>
    %44 = vector.multi_reduction <maximumf>, %43, %cst_22 [1] : vector<8x8xf32> to vector<8xf32>
    %45 = vector.shape_cast %44 : vector<8xf32> to vector<8x1xf32>
    %46 = vector.broadcast %45 : vector<8x1xf32> to vector<8x8xf32>
    %47 = arith.subf %43, %46 : vector<8x8xf32>
    %48 = math.exp %47 : vector<8x8xf32>
    %cst_23 = arith.constant dense<0.000000e+00> : vector<8xf32>
    %49 = vector.multi_reduction <add>, %48, %cst_23 [1] : vector<8x8xf32> to vector<8xf32>
    %50 = vector.shape_cast %49 : vector<8xf32> to vector<8x1xf32>
    %51 = tpu.reciprocal %50 : vector<8x1xf32> -> vector<8x1xf32>
    %52 = vector.broadcast %51 : vector<8x1xf32> to vector<8x8xf32>
    %53 = arith.mulf %48, %52 : vector<8x8xf32>
    %cst_24 = arith.constant dense<0.000000e+00> : vector<8x4xf32>
    %54 = tpu.matmul %53, %42, %cst_24 {dimension_numbers = #tpu.dot_dimension_numbers<[1], [0], [0], [1], [0, 0, 1, 1], [], []>} : vector<8x8xf32>, vector<8x4xf32>, vector<8x4xf32> -> vector<8x4xf32>
    %55 = vector.extract_strided_slice %24 {offsets = [0, 8], sizes = [8, 4], strides = [1, 1]} : vector<8x96xf32> to vector<8x4xf32>
    %56 = vector.extract_strided_slice %24 {offsets = [0, 40], sizes = [8, 4], strides = [1, 1]} : vector<8x96xf32> to vector<8x4xf32>
    %57 = vector.extract_strided_slice %24 {offsets = [0, 72], sizes = [8, 4], strides = [1, 1]} : vector<8x96xf32> to vector<8x4xf32>
    %cst_25 = arith.constant dense<0.000000e+00> : vector<8x8xf32>
    %58 = tpu.matmul %55, %56, %cst_25 {dimension_numbers = #tpu.dot_dimension_numbers<[1], [1], [0], [0], [0, 0, 1, 0], [], []>} : vector<8x4xf32>, vector<8x4xf32>, vector<8x8xf32> -> vector<8x8xf32>
    %cst_26 = arith.constant dense<0xFF800000> : vector<8xf32>
    %59 = vector.multi_reduction <maximumf>, %58, %cst_26 [1] : vector<8x8xf32> to vector<8xf32>
    %60 = vector.shape_cast %59 : vector<8xf32> to vector<8x1xf32>
    %61 = vector.broadcast %60 : vector<8x1xf32> to vector<8x8xf32>
    %62 = arith.subf %58, %61 : vector<8x8xf32>
    %63 = math.exp %62 : vector<8x8xf32>
    %cst_27 = arith.constant dense<0.000000e+00> : vector<8xf32>
    %64 = vector.multi_reduction <add>, %63, %cst_27 [1] : vector<8x8xf32> to vector<8xf32>
    %65 = vector.shape_cast %64 : vector<8xf32> to vector<8x1xf32>
    %66 = tpu.reciprocal %65 : vector<8x1xf32> -> vector<8x1xf32>
    %67 = vector.broadcast %66 : vector<8x1xf32> to vector<8x8xf32>
    %68 = arith.mulf %63, %67 : vector<8x8xf32>
    %cst_28 = arith.constant dense<0.000000e+00> : vector<8x4xf32>
    %69 = tpu.matmul %68, %57, %cst_28 {dimension_numbers = #tpu.dot_dimension_numbers<[1], [0], [0], [1], [0, 0, 1, 1], [], []>} : vector<8x8xf32>, vector<8x4xf32>, vector<8x4xf32> -> vector<8x4xf32>
    %70 = vector.extract_strided_slice %24 {offsets = [0, 12], sizes = [8, 4], strides = [1, 1]} : vector<8x96xf32> to vector<8x4xf32>
    %71 = vector.extract_strided_slice %24 {offsets = [0, 44], sizes = [8, 4], strides = [1, 1]} : vector<8x96xf32> to vector<8x4xf32>
    %72 = vector.extract_strided_slice %24 {offsets = [0, 76], sizes = [8, 4], strides = [1, 1]} : vector<8x96xf32> to vector<8x4xf32>
    %cst_29 = arith.constant dense<0.000000e+00> : vector<8x8xf32>
    %73 = tpu.matmul %70, %71, %cst_29 {dimension_numbers = #tpu.dot_dimension_numbers<[1], [1], [0], [0], [0, 0, 1, 0], [], []>} : vector<8x4xf32>, vector<8x4xf32>, vector<8x8xf32> -> vector<8x8xf32>
    %cst_30 = arith.constant dense<0xFF800000> : vector<8xf32>
    %74 = vector.multi_reduction <maximumf>, %73, %cst_30 [1] : vector<8x8xf32> to vector<8xf32>
    %75 = vector.shape_cast %74 : vector<8xf32> to vector<8x1xf32>
    %76 = vector.broadcast %75 : vector<8x1xf32> to vector<8x8xf32>
    %77 = arith.subf %73, %76 : vector<8x8xf32>
    %78 = math.exp %77 : vector<8x8xf32>
    %cst_31 = arith.constant dense<0.000000e+00> : vector<8xf32>
    %79 = vector.multi_reduction <add>, %78, %cst_31 [1] : vector<8x8xf32> to vector<8xf32>
    %80 = vector.shape_cast %79 : vector<8xf32> to vector<8x1xf32>
    %81 = tpu.reciprocal %80 : vector<8x1xf32> -> vector<8x1xf32>
    %82 = vector.broadcast %81 : vector<8x1xf32> to vector<8x8xf32>
    %83 = arith.mulf %78, %82 : vector<8x8xf32>
    %cst_32 = arith.constant dense<0.000000e+00> : vector<8x4xf32>
    %84 = tpu.matmul %83, %72, %cst_32 {dimension_numbers = #tpu.dot_dimension_numbers<[1], [0], [0], [1], [0, 0, 1, 1], [], []>} : vector<8x8xf32>, vector<8x4xf32>, vector<8x4xf32> -> vector<8x4xf32>
    %85 = vector.extract_strided_slice %24 {offsets = [0, 16], sizes = [8, 4], strides = [1, 1]} : vector<8x96xf32> to vector<8x4xf32>
    %86 = vector.extract_strided_slice %24 {offsets = [0, 48], sizes = [8, 4], strides = [1, 1]} : vector<8x96xf32> to vector<8x4xf32>
    %87 = vector.extract_strided_slice %24 {offsets = [0, 80], sizes = [8, 4], strides = [1, 1]} : vector<8x96xf32> to vector<8x4xf32>
    %cst_33 = arith.constant dense<0.000000e+00> : vector<8x8xf32>
    %88 = tpu.matmul %85, %86, %cst_33 {dimension_numbers = #tpu.dot_dimension_numbers<[1], [1], [0], [0], [0, 0, 1, 0], [], []>} : vector<8x4xf32>, vector<8x4xf32>, vector<8x8xf32> -> vector<8x8xf32>
    %cst_34 = arith.constant dense<0xFF800000> : vector<8xf32>
    %89 = vector.multi_reduction <maximumf>, %88, %cst_34 [1] : vector<8x8xf32> to vector<8xf32>
    %90 = vector.shape_cast %89 : vector<8xf32> to vector<8x1xf32>
    %91 = vector.broadcast %90 : vector<8x1xf32> to vector<8x8xf32>
    %92 = arith.subf %88, %91 : vector<8x8xf32>
    %93 = math.exp %92 : vector<8x8xf32>
    %cst_35 = arith.constant dense<0.000000e+00> : vector<8xf32>
    %94 = vector.multi_reduction <add>, %93, %cst_35 [1] : vector<8x8xf32> to vector<8xf32>
    %95 = vector.shape_cast %94 : vector<8xf32> to vector<8x1xf32>
    %96 = tpu.reciprocal %95 : vector<8x1xf32> -> vector<8x1xf32>
    %97 = vector.broadcast %96 : vector<8x1xf32> to vector<8x8xf32>
    %98 = arith.mulf %93, %97 : vector<8x8xf32>
    %cst_36 = arith.constant dense<0.000000e+00> : vector<8x4xf32>
    %99 = tpu.matmul %98, %87, %cst_36 {dimension_numbers = #tpu.dot_dimension_numbers<[1], [0], [0], [1], [0, 0, 1, 1], [], []>} : vector<8x8xf32>, vector<8x4xf32>, vector<8x4xf32> -> vector<8x4xf32>
    %100 = vector.extract_strided_slice %24 {offsets = [0, 20], sizes = [8, 4], strides = [1, 1]} : vector<8x96xf32> to vector<8x4xf32>
    %101 = vector.extract_strided_slice %24 {offsets = [0, 52], sizes = [8, 4], strides = [1, 1]} : vector<8x96xf32> to vector<8x4xf32>
    %102 = vector.extract_strided_slice %24 {offsets = [0, 84], sizes = [8, 4], strides = [1, 1]} : vector<8x96xf32> to vector<8x4xf32>
    %cst_37 = arith.constant dense<0.000000e+00> : vector<8x8xf32>
    %103 = tpu.matmul %100, %101, %cst_37 {dimension_numbers = #tpu.dot_dimension_numbers<[1], [1], [0], [0], [0, 0, 1, 0], [], []>} : vector<8x4xf32>, vector<8x4xf32>, vector<8x8xf32> -> vector<8x8xf32>
    %cst_38 = arith.constant dense<0xFF800000> : vector<8xf32>
    %104 = vector.multi_reduction <maximumf>, %103, %cst_38 [1] : vector<8x8xf32> to vector<8xf32>
    %105 = vector.shape_cast %104 : vector<8xf32> to vector<8x1xf32>
    %106 = vector.broadcast %105 : vector<8x1xf32> to vector<8x8xf32>
    %107 = arith.subf %103, %106 : vector<8x8xf32>
    %108 = math.exp %107 : vector<8x8xf32>
    %cst_39 = arith.constant dense<0.000000e+00> : vector<8xf32>
    %109 = vector.multi_reduction <add>, %108, %cst_39 [1] : vector<8x8xf32> to vector<8xf32>
    %110 = vector.shape_cast %109 : vector<8xf32> to vector<8x1xf32>
    %111 = tpu.reciprocal %110 : vector<8x1xf32> -> vector<8x1xf32>
    %112 = vector.broadcast %111 : vector<8x1xf32> to vector<8x8xf32>
    %113 = arith.mulf %108, %112 : vector<8x8xf32>
    %cst_40 = arith.constant dense<0.000000e+00> : vector<8x4xf32>
    %114 = tpu.matmul %113, %102, %cst_40 {dimension_numbers = #tpu.dot_dimension_numbers<[1], [0], [0], [1], [0, 0, 1, 1], [], []>} : vector<8x8xf32>, vector<8x4xf32>, vector<8x4xf32> -> vector<8x4xf32>
    %115 = vector.extract_strided_slice %24 {offsets = [0, 24], sizes = [8, 4], strides = [1, 1]} : vector<8x96xf32> to vector<8x4xf32>
    %116 = vector.extract_strided_slice %24 {offsets = [0, 56], sizes = [8, 4], strides = [1, 1]} : vector<8x96xf32> to vector<8x4xf32>
    %117 = vector.extract_strided_slice %24 {offsets = [0, 88], sizes = [8, 4], strides = [1, 1]} : vector<8x96xf32> to vector<8x4xf32>
    %cst_41 = arith.constant dense<0.000000e+00> : vector<8x8xf32>
    %118 = tpu.matmul %115, %116, %cst_41 {dimension_numbers = #tpu.dot_dimension_numbers<[1], [1], [0], [0], [0, 0, 1, 0], [], []>} : vector<8x4xf32>, vector<8x4xf32>, vector<8x8xf32> -> vector<8x8xf32>
    %cst_42 = arith.constant dense<0xFF800000> : vector<8xf32>
    %119 = vector.multi_reduction <maximumf>, %118, %cst_42 [1] : vector<8x8xf32> to vector<8xf32>
    %120 = vector.shape_cast %119 : vector<8xf32> to vector<8x1xf32>
    %121 = vector.broadcast %120 : vector<8x1xf32> to vector<8x8xf32>
    %122 = arith.subf %118, %121 : vector<8x8xf32>
    %123 = math.exp %122 : vector<8x8xf32>
    %cst_43 = arith.constant dense<0.000000e+00> : vector<8xf32>
    %124 = vector.multi_reduction <add>, %123, %cst_43 [1] : vector<8x8xf32> to vector<8xf32>
    %125 = vector.shape_cast %124 : vector<8xf32> to vector<8x1xf32>
    %126 = tpu.reciprocal %125 : vector<8x1xf32> -> vector<8x1xf32>
    %127 = vector.broadcast %126 : vector<8x1xf32> to vector<8x8xf32>
    %128 = arith.mulf %123, %127 : vector<8x8xf32>
    %cst_44 = arith.constant dense<0.000000e+00> : vector<8x4xf32>
    %129 = tpu.matmul %128, %117, %cst_44 {dimension_numbers = #tpu.dot_dimension_numbers<[1], [0], [0], [1], [0, 0, 1, 1], [], []>} : vector<8x8xf32>, vector<8x4xf32>, vector<8x4xf32> -> vector<8x4xf32>
    %130 = vector.extract_strided_slice %24 {offsets = [0, 28], sizes = [8, 4], strides = [1, 1]} : vector<8x96xf32> to vector<8x4xf32>
    %131 = vector.extract_strided_slice %24 {offsets = [0, 60], sizes = [8, 4], strides = [1, 1]} : vector<8x96xf32> to vector<8x4xf32>
    %132 = vector.extract_strided_slice %24 {offsets = [0, 92], sizes = [8, 4], strides = [1, 1]} : vector<8x96xf32> to vector<8x4xf32>
    %cst_45 = arith.constant dense<0.000000e+00> : vector<8x8xf32>
    %133 = tpu.matmul %130, %131, %cst_45 {dimension_numbers = #tpu.dot_dimension_numbers<[1], [1], [0], [0], [0, 0, 1, 0], [], []>} : vector<8x4xf32>, vector<8x4xf32>, vector<8x8xf32> -> vector<8x8xf32>
    %cst_46 = arith.constant dense<0xFF800000> : vector<8xf32>
    %134 = vector.multi_reduction <maximumf>, %133, %cst_46 [1] : vector<8x8xf32> to vector<8xf32>
    %135 = vector.shape_cast %134 : vector<8xf32> to vector<8x1xf32>
    %136 = vector.broadcast %135 : vector<8x1xf32> to vector<8x8xf32>
    %137 = arith.subf %133, %136 : vector<8x8xf32>
    %138 = math.exp %137 : vector<8x8xf32>
    %cst_47 = arith.constant dense<0.000000e+00> : vector<8xf32>
    %139 = vector.multi_reduction <add>, %138, %cst_47 [1] : vector<8x8xf32> to vector<8xf32>
    %140 = vector.shape_cast %139 : vector<8xf32> to vector<8x1xf32>
    %141 = tpu.reciprocal %140 : vector<8x1xf32> -> vector<8x1xf32>
    %142 = vector.broadcast %141 : vector<8x1xf32> to vector<8x8xf32>
    %143 = arith.mulf %138, %142 : vector<8x8xf32>
    %cst_48 = arith.constant dense<0.000000e+00> : vector<8x4xf32>
    %144 = tpu.matmul %143, %132, %cst_48 {dimension_numbers = #tpu.dot_dimension_numbers<[1], [0], [0], [1], [0, 0, 1, 1], [], []>} : vector<8x8xf32>, vector<8x4xf32>, vector<8x4xf32> -> vector<8x4xf32>
    %145 = tpu.concatenate %39, %54, %69, %84, %99, %114, %129, %144 in 1 : vector<8x4xf32>, vector<8x4xf32>, vector<8x4xf32>, vector<8x4xf32>, vector<8x4xf32>, vector<8x4xf32>, vector<8x4xf32>, vector<8x4xf32> -> vector<8x32xf32>
    %cst_49 = arith.constant dense<0.000000e+00> : vector<8x32xf32>
    %146 = tpu.matmul %145, %7, %cst_49 {dimension_numbers = #tpu.dot_dimension_numbers<[1], [0], [0], [1], [0, 0, 1, 1], [], []>} : vector<8x32xf32>, vector<32x32xf32>, vector<8x32xf32> -> vector<8x32xf32>
    %147 = vector.broadcast %15 : vector<1x32xf32> to vector<8x32xf32>
    %148 = arith.addf %146, %147 : vector<8x32xf32>
    %149 = arith.addf %3, %148 : vector<8x32xf32>
    %cst_50 = arith.constant dense<0.000000e+00> : vector<8xf32>
    %150 = vector.multi_reduction <add>, %149, %cst_50 [1] : vector<8x32xf32> to vector<8xf32>
    %151 = vector.shape_cast %150 : vector<8xf32> to vector<8x1xf32>
    %cst_51 = arith.constant 3.200000e+01 : f32
    %152 = vector.broadcast %cst_51 : f32 to vector<8x1xf32>
    %153 = arith.divf %151, %152 : vector<8x1xf32>
    %154 = vector.broadcast %153 : vector<8x1xf32> to vector<8x32xf32>
    %155 = arith.subf %149, %154 : vector<8x32xf32>
    %156 = arith.mulf %155, %155 : vector<8x32xf32>
    %cst_52 = arith.constant dense<0.000000e+00> : vector<8xf32>
    %157 = vector.multi_reduction <add>, %156, %cst_52 [1] : vector<8x32xf32> to vector<8xf32>
    %158 = vector.shape_cast %157 : vector<8xf32> to vector<8x1xf32>
    %cst_53 = arith.constant 3.200000e+01 : f32
    %159 = vector.broadcast %cst_53 : f32 to vector<8x1xf32>
    %160 = arith.divf %158, %159 : vector<8x1xf32>
    %161 = vector.broadcast %153 : vector<8x1xf32> to vector<8x32xf32>
    %162 = arith.subf %149, %161 : vector<8x32xf32>
    %cst_54 = arith.constant 9.99999974E-6 : f32
    %163 = vector.broadcast %cst_54 : f32 to vector<8x1xf32>
    %164 = arith.addf %160, %163 : vector<8x1xf32>
    %165 = math.rsqrt %164 : vector<8x1xf32>
    %166 = vector.broadcast %165 : vector<8x1xf32> to vector<8x32xf32>
    %167 = arith.mulf %162, %166 : vector<8x32xf32>
    %168 = vector.broadcast %18 : vector<1x32xf32> to vector<8x32xf32>
    %169 = arith.mulf %167, %168 : vector<8x32xf32>
    %170 = vector.broadcast %19 : vector<1x32xf32> to vector<8x32xf32>
    %171 = arith.addf %169, %170 : vector<8x32xf32>
    %cst_55 = arith.constant dense<0.000000e+00> : vector<8x64xf32>
    %172 = tpu.matmul %171, %9, %cst_55 {dimension_numbers = #tpu.dot_dimension_numbers<[1], [0], [0], [1], [0, 0, 1, 1], [], []>} : vector<8x32xf32>, vector<32x64xf32>, vector<8x64xf32> -> vector<8x64xf32>
    %173 = vector.broadcast %16 : vector<1x64xf32> to vector<8x64xf32>
    %174 = arith.addf %172, %173 : vector<8x64xf32>
    %cst_56 = arith.constant 0.000000e+00 : f32
    %175 = vector.broadcast %cst_56 : f32 to vector<8x64xf32>
    %176 = arith.maximumf %174, %175 : vector<8x64xf32>
    %cst_57 = arith.constant dense<0.000000e+00> : vector<8x32xf32>
    %177 = tpu.matmul %176, %11, %cst_57 {dimension_numbers = #tpu.dot_dimension_numbers<[1], [0], [0], [1], [0, 0, 1, 1], [], []>} : vector<8x64xf32>, vector<64x32xf32>, vector<8x32xf32> -> vector<8x32xf32>
    %178 = vector.broadcast %17 : vector<1x32xf32> to vector<8x32xf32>
    %179 = arith.addf %177, %178 : vector<8x32xf32>
    %180 = arith.addf %171, %179 : vector<8x32xf32>
    %cst_58 = arith.constant dense<0.000000e+00> : vector<8xf32>
    %181 = vector.multi_reduction <add>, %180, %cst_58 [1] : vector<8x32xf32> to vector<8xf32>
    %182 = vector.shape_cast %181 : vector<8xf32> to vector<8x1xf32>
    %cst_59 = arith.constant 3.200000e+01 : f32
    %183 = vector.broadcast %cst_59 : f32 to vector<8x1xf32>
    %184 = arith.divf %182, %183 : vector<8x1xf32>
    %185 = vector.broadcast %184 : vector<8x1xf32> to vector<8x32xf32>
    %186 = arith.subf %180, %185 : vector<8x32xf32>
    %187 = arith.mulf %186, %186 : vector<8x32xf32>
    %cst_60 = arith.constant dense<0.000000e+00> : vector<8xf32>
    %188 = vector.multi_reduction <add>, %187, %cst_60 [1] : vector<8x32xf32> to vector<8xf32>
    %189 = vector.shape_cast %188 : vector<8xf32> to vector<8x1xf32>
    %cst_61 = arith.constant 3.200000e+01 : f32
    %190 = vector.broadcast %cst_61 : f32 to vector<8x1xf32>
    %191 = arith.divf %189, %190 : vector<8x1xf32>
    %192 = vector.broadcast %184 : vector<8x1xf32> to vector<8x32xf32>
    %193 = arith.subf %180, %192 : vector<8x32xf32>
    %cst_62 = arith.constant 9.99999974E-6 : f32
    %194 = vector.broadcast %cst_62 : f32 to vector<8x1xf32>
    %195 = arith.addf %191, %194 : vector<8x1xf32>
    %196 = math.rsqrt %195 : vector<8x1xf32>
    %197 = vector.broadcast %196 : vector<8x1xf32> to vector<8x32xf32>
    %198 = arith.mulf %193, %197 : vector<8x32xf32>
    %199 = vector.broadcast %20 : vector<1x32xf32> to vector<8x32xf32>
    %200 = arith.mulf %198, %199 : vector<8x32xf32>
    %201 = vector.broadcast %21 : vector<1x32xf32> to vector<8x32xf32>
    %202 = arith.addf %200, %201 : vector<8x32xf32>
    %c0_63 = arith.constant 0 : index
    %c0_64 = arith.constant 0 : index
    %203 = vector.load %arg9[%c0_63, %c0_64] : memref<8x32xf32, #tpu.memory_space<vmem>>, vector<8x32xf32>
    tpu.vector_store %arg9[%c0_63, %c0_64], %202 {strides = array<i32>} : memref<8x32xf32, #tpu.memory_space<vmem>>, vector<8x32xf32>,
    %c1_i32 = arith.constant 1 : i32
    %204 = arith.cmpi eq, %arg1, %c1_i32 : i32
    %205 = arith.extui %204 : i1 to i32
    %c0_i32_65 = arith.constant 0 : i32
    %206 = arith.cmpi ne, %205, %c0_i32_65 : i32
    scf.if %206 {
      %c0_66 = arith.constant 0 : index
      %c0_67 = arith.constant 0 : index
      %c0_68 = arith.constant 0 : index
      %207 = vector.load %arg8[%c0_66, %c0_67, %c0_68] : memref<1x8x32xf32, #tpu.memory_space<vmem>>, vector<1x8x32xf32>
      %208 = vector.shape_cast %207 : vector<1x8x32xf32> to vector<8x32xf32>
      %209 = vector.shape_cast %202 : vector<8x32xf32> to vector<1x8x32xf32>
      tpu.vector_store %arg8[%c0_66, %c0_67, %c0_68], %209 {strides = array<i32>} : memref<1x8x32xf32, #tpu.memory_space<vmem>>, vector<1x8x32xf32>,
    } else {
    }
    return
  }
  func.func @transform_0(%arg0: i32, %arg1: i32) -> (i32, i32, i32) {
    %c0_i32 = arith.constant 0 : i32
    %c0_i32_0 = arith.constant 0 : i32
    %c0_i32_1 = arith.constant 0 : i32
    return %arg0, %c0_i32, %c0_i32_0 : i32, i32, i32
  }
  func.func @transform_1(%arg0: i32, %arg1: i32) -> (i32, i32, i32) {
    %c0_i32 = arith.constant 0 : i32
    %c0_i32_0 = arith.constant 0 : i32
    %c0_i32_1 = arith.constant 0 : i32
    return %arg1, %c0_i32, %c0_i32_0 : i32, i32, i32
  }
  func.func @transform_2(%arg0: i32, %arg1: i32) -> (i32, i32, i32) {
    %c0_i32 = arith.constant 0 : i32
    %c0_i32_0 = arith.constant 0 : i32
    %c0_i32_1 = arith.constant 0 : i32
    return %arg1, %c0_i32, %c0_i32_0 : i32, i32, i32
  }
  func.func @transform_3(%arg0: i32, %arg1: i32) -> (i32, i32, i32) {
    %c0_i32 = arith.constant 0 : i32
    %c0_i32_0 = arith.constant 0 : i32
    %c0_i32_1 = arith.constant 0 : i32
    return %arg1, %c0_i32, %c0_i32_0 : i32, i32, i32
  }
  func.func @transform_4(%arg0: i32, %arg1: i32) -> (i32, i32, i32) {
    %c0_i32 = arith.constant 0 : i32
    %c0_i32_0 = arith.constant 0 : i32
    %c0_i32_1 = arith.constant 0 : i32
    return %arg1, %c0_i32, %c0_i32_0 : i32, i32, i32
  }
  func.func @transform_5(%arg0: i32, %arg1: i32) -> (i32, i32, i32) {
    %c0_i32 = arith.constant 0 : i32
    %c0_i32_0 = arith.constant 0 : i32
    %c0_i32_1 = arith.constant 0 : i32
    return %arg1, %c0_i32, %c0_i32_0 : i32, i32, i32
  }
  func.func @transform_6(%arg0: i32, %arg1: i32) -> (i32, i32, i32) {
    %c0_i32 = arith.constant 0 : i32
    %c0_i32_0 = arith.constant 0 : i32
    %c0_i32_1 = arith.constant 0 : i32
    return %arg0, %c0_i32, %c0_i32_0 : i32, i32, i32
  }
}

</mosaic_0001>

<llo_original>
// kernel: tpu_custom_call.1
$region0: #{tpu_custom_call.1}
  #allocation0 [shape = 'u32[]', space=smem, size = 0x4, offset = 0x4, fixed_abs, tag = 'smem constant byte address 0x4 - core index']
  #allocation1 [shape = 'u32[144,128]{1,0:T(1,128)}', space=vmem, size = 0x12000, scoped, tag = 'internal scratch']
  #allocation2 [shape = 'f32[8,32]{1,0:T(8,128)}', space=vmem, size = 0x1000, scoped, tag = 'scratch operand']
  %s0 = inlined_call_operand.hbm [shape: f32[2,8,32], index: 0, kind: input, shape index: {}]
  %s1 = inlined_call_operand.hbm [shape: f32[2,32,96], index: 1, kind: input, shape index: {}]
  %s2 = inlined_call_operand.hbm [shape: f32[2,32,32], index: 2, kind: input, shape index: {}]
  %s3 = inlined_call_operand.hbm [shape: f32[2,32,64], index: 3, kind: input, shape index: {}]
  %s4 = inlined_call_operand.hbm [shape: f32[2,64,32], index: 4, kind: input, shape index: {}]
  %s5 = inlined_call_operand.hbm [shape: f32[2,8,96], index: 5, kind: input, shape index: {}]
  %s6 = inlined_call_operand.hbm [shape: f32[2,8,32], index: 6, kind: output, shape index: {}]
  %s7 = sld [smem:[#allocation0]]
  $region89: #{tpu_custom_call.1} parent=0
    _
  %s9 = ssub.s32 1, %s7
  %s10 = scalar_select 0, %s9, %s7
  $region1: #{tpu_custom_call.1} parent=0
    #allocation3 [shape = 'u8[8192]{0}', space=vmem, size = 0x2000, scoped, tag = 'input window, operand 0']
    #allocation4 [shape = 's32[2]{0}', space=sflag, size = 0x8, scoped, tag = 'scoped memory for tpu_custom_call.1']
    #allocation5 [shape = 's32[2]{0}', space=sflag, size = 0x8, scoped, tag = 'scoped memory for tpu_custom_call.1']
    #allocation6 [shape = 'u8[32768]{0}', space=vmem, size = 0x8000, scoped, tag = 'input window, operand 1']
    #allocation7 [shape = 's32[2]{0}', space=sflag, size = 0x8, scoped, tag = 'scoped memory for tpu_custom_call.1']
    #allocation8 [shape = 'u8[32768]{0}', space=vmem, size = 0x8000, scoped, tag = 'input window, operand 2']
    #allocation9 [shape = 'u8[32768]{0}', space=vmem, size = 0x8000, scoped, tag = 'input window, operand 3']
    #allocation10 [shape = 's32[2]{0}', space=sflag, size = 0x8, scoped, tag = 'scoped memory for tpu_custom_call.1']
    #allocation11 [shape = 'u8[65536]{0}', space=vmem, size = 0x10000, scoped, tag = 'input window, operand 4']
    #allocation12 [shape = 'u8[8192]{0}', space=vmem, size = 0x2000, scoped, tag = 'input window, operand 5']
    #allocation13 [shape = 's32[2]{0}', space=sflag, size = 0x8, scoped, tag = 'scoped memory for tpu_custom_call.1']
    #allocation14 [shape = 'u8[8192]{0}', space=vmem, size = 0x2000, scoped, tag = 'output window, operand 0']
    %11 = vsyncpa [#allocation4], 0
    %s12 = scalar_lea.sflag [#allocation4], 1
    %13 = vsyncpa %s12, 0
    %14 = vsyncpa [#allocation7], 0
    %s15 = scalar_lea.sflag [#allocation7], 1
    %16 = vsyncpa %s15, 0
    %17 = vsyncpa [#allocation10], 0
    %s18 = scalar_lea.sflag [#allocation10], 1
    %19 = vsyncpa %s18, 0
    %20 = vsyncpa [#allocation13], 0
    %s21 = scalar_lea.sflag [#allocation13], 1
    %22 = vsyncpa %s21, 0
    %23 = vsyncpa [#allocation5], 0
    %s24 = scalar_lea.sflag [#allocation5], 1
    %25 = vsyncpa %s24, 0
    loop: start=0, step=1, limit=6
    $region2: #{tpu_custom_call.1} parent=1 // loop_pre_header
      _
    $region3: #{tpu_custom_call.1} parent=1 // loop_header
      %s27 = sphi 0, %s31
      %p28 = scmp.ge.s32.totalorder %s27, 6
      %s34 = sphi 0, %s46
      %s35 = sphi 0, %s42
      %s36 = sphi 0, %s34
      %s37 = sphi 0, %s35
      %s38 = sphi 0, %s36
      %s39 = sphi 0, %s37
      %s49 = sphi 0, %s51
      %s52 = sphi 0, %s49
      %s53 = sphi 0, %s52
      %s69 = sphi 0, %s53
      %s75 = sphi 0, %s77
      %s78 = sphi 0, %s75
      %s79 = sphi 0, %s78
      %s95 = sphi 0, %s79
      %s101 = sphi 0, %s103
      %s104 = sphi 0, %s101
      %s105 = sphi 0, %s104
      %s121 = sphi 0, %s105
      %s127 = sphi 0, %s129
      %s130 = sphi 0, %s127
      %s131 = sphi 0, %s130
      %s147 = sphi 0, %s131
      %s153 = sphi 0, %s155
      %s156 = sphi 0, %s153
      %s157 = sphi 0, %s156
      %s173 = sphi 0, %s157
      %s179 = sphi 0, %s181
      %s182 = sphi 0, %s179
      %s183 = sphi 0, %s182
      %s199 = sphi 0, %s183
      %s205 = sphi 0, %s207
      %s208 = sphi 0, %s205
      %s209 = sphi 0, %s208
      %s225 = sphi 0, %s209
    $region4: #{tpu_custom_call.1} parent=1 // loop_header_branch
      %30 = sbr.rel (%p28) target = $region8
    $region5: #{tpu_custom_call.1} parent=1 // loop_body
      %s32 = ssub.s32 %s27, 1
      %s33 = ssub.s32 %s27, 2
      %s40 = sadd.s32 1, %s35
      %p41 = scmp.ge.s32.totalorder %s40, 2
      %s42 = scalar_select %p41, 0, %s40
      %s43 = sadd.s32 1, %s34
      %s44 = scalar_select %p41, %s43, %s34
      %p45 = scmp.ge.s32.totalorder %s44, 2
      %s46 = scalar_select %p45, 0, %s44
      %s47 = ssub.s32 %s34, %s46
      %p48 = scmp.eq.s32.totalorder %s47, 0
      %s50 = sadd.s32 %s49, 1
      %s51 = scalar_select %p48, %s49, %s50
      %p54 = pneg %p48
      %p55 = scmp.eq.s32.totalorder %s27, 3
      %p56 = por %p54, %p55
      %p57 = scmp.ne.s32.totalorder %s49, %s52
      %p58 = scmp.eq.s32.totalorder %s27, 0
      %p59 = por %p57, %p58
      %p60 = scmp.ne.s32.totalorder %s49, %s52
      %p61 = scmp.eq.s32.totalorder %s32, 3
      %p62 = por %p60, %p61
      %p63 = scmp.ne.s32.totalorder %s52, %s53
      %p64 = scmp.eq.s32.totalorder %s32, 0
      %p65 = por %p63, %p64
      %p66 = scmp.ne.s32.totalorder %s52, %s53
      %p67 = scmp.eq.s32.totalorder %s33, 3
      %p68 = por %p66, %p67
      %p70 = scmp.ne.s32.totalorder %s53, %s69
      %p71 = scmp.eq.s32.totalorder %s33, 0
      %p72 = por %p70, %p71
      %s73 = ssub.s32 %s35, %s42
      %p74 = scmp.eq.s32.totalorder %s73, 0
      %s76 = sadd.s32 %s75, 1
      %s77 = scalar_select %p74, %s75, %s76
      %p80 = pneg %p74
      %p81 = scmp.eq.s32.totalorder %s27, 3
      %p82 = por %p80, %p81
      %p83 = scmp.ne.s32.totalorder %s75, %s78
      %p84 = scmp.eq.s32.totalorder %s27, 0
      %p85 = por %p83, %p84
      %p86 = scmp.ne.s32.totalorder %s75, %s78
      %p87 = scmp.eq.s32.totalorder %s32, 3
      %p88 = por %p86, %p87
      %p89 = scmp.ne.s32.totalorder %s78, %s79
      %p90 = scmp.eq.s32.totalorder %s32, 0
      %p91 = por %p89, %p90
      %p92 = scmp.ne.s32.totalorder %s78, %s79
      %p93 = scmp.eq.s32.totalorder %s33, 3
      %p94 = por %p92, %p93
      %p96 = scmp.ne.s32.totalorder %s79, %s95
      %p97 = scmp.eq.s32.totalorder %s33, 0
      %p98 = por %p96, %p97
      %s99 = ssub.s32 %s35, %s42
      %p100 = scmp.eq.s32.totalorder %s99, 0
      %s102 = sadd.s32 %s101, 1
      %s103 = scalar_select %p100, %s101, %s102
      %p106 = pneg %p100
      %p107 = scmp.eq.s32.totalorder %s27, 3
      %p108 = por %p106, %p107
      %p109 = scmp.ne.s32.totalorder %s101, %s104
      %p110 = scmp.eq.s32.totalorder %s27, 0
      %p111 = por %p109, %p110
      %p112 = scmp.ne.s32.totalorder %s101, %s104
      %p113 = scmp.eq.s32.totalorder %s32, 3
      %p114 = por %p112, %p113
      %p115 = scmp.ne.s32.totalorder %s104, %s105
      %p116 = scmp.eq.s32.totalorder %s32, 0
      %p117 = por %p115, %p116
      %p118 = scmp.ne.s32.totalorder %s104, %s105
      %p119 = scmp.eq.s32.totalorder %s33, 3
      %p120 = por %p118, %p119
      %p122 = scmp.ne.s32.totalorder %s105, %s121
      %p123 = scmp.eq.s32.totalorder %s33, 0
      %p124 = por %p122, %p123
      %s125 = ssub.s32 %s35, %s42
      %p126 = scmp.eq.s32.totalorder %s125, 0
      %s128 = sadd.s32 %s127, 1
      %s129 = scalar_select %p126, %s127, %s128
      %p132 = pneg %p126
      %p133 = scmp.eq.s32.totalorder %s27, 3
      %p134 = por %p132, %p133
      %p135 = scmp.ne.s32.totalorder %s127, %s130
      %p136 = scmp.eq.s32.totalorder %s27, 0
      %p137 = por %p135, %p136
      %p138 = scmp.ne.s32.totalorder %s127, %s130
      %p139 = scmp.eq.s32.totalorder %s32, 3
      %p140 = por %p138, %p139
      %p141 = scmp.ne.s32.totalorder %s130, %s131
      %p142 = scmp.eq.s32.totalorder %s32, 0
      %p143 = por %p141, %p142
      %p144 = scmp.ne.s32.totalorder %s130, %s131
      %p145 = scmp.eq.s32.totalorder %s33, 3
      %p146 = por %p144, %p145
      %p148 = scmp.ne.s32.totalorder %s131, %s147
      %p149 = scmp.eq.s32.totalorder %s33, 0
      %p150 = por %p148, %p149
      %s151 = ssub.s32 %s35, %s42
      %p152 = scmp.eq.s32.totalorder %s151, 0
      %s154 = sadd.s32 %s153, 1
      %s155 = scalar_select %p152, %s153, %s154
      %p158 = pneg %p152
      %p159 = scmp.eq.s32.totalorder %s27, 3
      %p160 = por %p158, %p159
      %p161 = scmp.ne.s32.totalorder %s153, %s156
      %p162 = scmp.eq.s32.totalorder %s27, 0
      %p163 = por %p161, %p162
      %p164 = scmp.ne.s32.totalorder %s153, %s156
      %p165 = scmp.eq.s32.totalorder %s32, 3
      %p166 = por %p164, %p165
      %p167 = scmp.ne.s32.totalorder %s156, %s157
      %p168 = scmp.eq.s32.totalorder %s32, 0
      %p169 = por %p167, %p168
      %p170 = scmp.ne.s32.totalorder %s156, %s157
      %p171 = scmp.eq.s32.totalorder %s33, 3
      %p172 = por %p170, %p171
      %p174 = scmp.ne.s32.totalorder %s157, %s173
      %p175 = scmp.eq.s32.totalorder %s33, 0
      %p176 = por %p174, %p175
      %s177 = ssub.s32 %s35, %s42
      %p178 = scmp.eq.s32.totalorder %s177, 0
      %s180 = sadd.s32 %s179, 1
      %s181 = scalar_select %p178, %s179, %s180
      %p184 = pneg %p178
      %p185 = scmp.eq.s32.totalorder %s27, 3
      %p186 = por %p184, %p185
      %p187 = scmp.ne.s32.totalorder %s179, %s182
      %p188 = scmp.eq.s32.totalorder %s27, 0
      %p189 = por %p187, %p188
      %p190 = scmp.ne.s32.totalorder %s179, %s182
      %p191 = scmp.eq.s32.totalorder %s32, 3
      %p192 = por %p190, %p191
      %p193 = scmp.ne.s32.totalorder %s182, %s183
      %p194 = scmp.eq.s32.totalorder %s32, 0
      %p195 = por %p193, %p194
      %p196 = scmp.ne.s32.totalorder %s182, %s183
      %p197 = scmp.eq.s32.totalorder %s33, 3
      %p198 = por %p196, %p197
      %p200 = scmp.ne.s32.totalorder %s183, %s199
      %p201 = scmp.eq.s32.totalorder %s33, 0
      %p202 = por %p200, %p201
      %s203 = ssub.s32 %s34, %s46
      %p204 = scmp.eq.s32.totalorder %s203, 0
      %s206 = sadd.s32 %s205, 1
      %s207 = scalar_select %p204, %s205, %s206
      %p210 = pneg %p204
      %p211 = scmp.eq.s32.totalorder %s27, 3
      %p212 = por %p210, %p211
      %p213 = scmp.ne.s32.totalorder %s205, %s208
      %p214 = scmp.eq.s32.totalorder %s27, 0
      %p215 = por %p213, %p214
      %p216 = scmp.ne.s32.totalorder %s205, %s208
      %p217 = scmp.eq.s32.totalorder %s32, 3
      %p218 = por %p216, %p217
      %p219 = scmp.ne.s32.totalorder %s208, %s209
      %p220 = scmp.eq.s32.totalorder %s32, 0
      %p221 = por %p219, %p220
      %p222 = scmp.ne.s32.totalorder %s208, %s209
      %p223 = scmp.eq.s32.totalorder %s33, 3
      %p224 = por %p222, %p223
      %p226 = scmp.ne.s32.totalorder %s209, %s225
      %p227 = scmp.eq.s32.totalorder %s33, 0
      %p228 = por %p226, %p227
      %p229 = scmp.le.s32.totalorder 1, %s27
      %p230 = scmp.lt.s32.totalorder %s27, 5
      %p231 = pnand %p229, %p230
      %p232 = pneg %p231
      // Predicated region
      $region9: #{tpu_custom_call.1} parent=5 // pred_check
        _
      $region10: #{tpu_custom_call.1} parent=5 // pred_check_branch
        %234 = sbr.rel (%p231) target = $region12
      $region11: #{tpu_custom_call.1} parent=5 // pred_region
        %s235 = ssub.s32 %s27, 1
      $region12: #{tpu_custom_call.1} parent=5 // pred_fallthru
        _
      %p236 = scmp.lt.s32.totalorder %s27, 4
      // Predicated region
      $region13: #{tpu_custom_call.1} parent=5 // pred_check
        %p237 = pneg %p236
      $region14: #{tpu_custom_call.1} parent=5 // pred_check_branch
        %239 = sbr.rel (%p237) target = $region16
      $region15: #{tpu_custom_call.1} parent=5 // pred_region
        // Predicated region
        $region17: #{tpu_custom_call.1} parent=15 // pred_check
          %p240 = pneg %p59
        $region18: #{tpu_custom_call.1} parent=15 // pred_check_branch
          %242 = sbr.rel (%p240) target = $region20
        $region19: #{tpu_custom_call.1} parent=15 // pred_region
          %s243 = sand.u32 %s49, 1
          %s244 = scalar_lea.sflag [#allocation4], %s243
          %s245 = sand.u32 %s49, 1
          %s246 = smul.addr %s245, 8
          %s247 = scalar_lea.vmem [#allocation3], %s246
          %s249 = ssub.s32 128, 128
          %250 = vsyncadd %s244, %s249
          %s251 = smul.addr %s34, 128
          %s252 = scalar_lea.hbm %s0, %s251
          %s254 = sshll.u32 %s247, 4
          %s255 = int_to_ptr.vmem [resolvable:$true] %s254
          %257 = dma.hbm_to_vmem [thread:$0]  %s252, 128, %s255, %s244
        $region20: #{tpu_custom_call.1} parent=15 // pred_fallthru
          _
        // Predicated region
        $region21: #{tpu_custom_call.1} parent=15 // pred_check
          %p258 = pneg %p85
        $region22: #{tpu_custom_call.1} parent=15 // pred_check_branch
          %260 = sbr.rel (%p258) target = $region24
        $region23: #{tpu_custom_call.1} parent=15 // pred_region
          %s261 = sand.u32 %s27, 1
          %s262 = scalar_lea.sflag [#allocation7], %s261
          %s263 = sand.u32 %s75, 1
          %s264 = smul.addr %s263, 32
          %s265 = scalar_lea.vmem [#allocation6], %s264
          %s267 = ssub.s32 512, 512
          %268 = vsyncadd %s262, %s267
          %s269 = smul.addr %s35, 4
          %s270 = smul.addr %s269, 128
          %s271 = scalar_lea.hbm %s1, %s270
          %s272 = sshll.u32 %s265, 4
          %s273 = int_to_ptr.vmem [resolvable:$true] %s272
          %278 = dma.hbm_to_vmem [thread:$0]  %s271, 512, %s273, %s262, 128, 128, 8
        $region24: #{tpu_custom_call.1} parent=15 // pred_fallthru
          _
        // Predicated region
        $region25: #{tpu_custom_call.1} parent=15 // pred_check
          %p279 = pneg %p111
        $region26: #{tpu_custom_call.1} parent=15 // pred_check_branch
          %281 = sbr.rel (%p279) target = $region28
        $region27: #{tpu_custom_call.1} parent=15 // pred_region
          %s282 = sand.u32 %s27, 1
          %s283 = scalar_lea.sflag [#allocation7], %s282
          %s284 = sand.u32 %s101, 1
          %s285 = smul.addr %s284, 32
          %s286 = scalar_lea.vmem [#allocation8], %s285
          %s288 = ssub.s32 512, 512
          %289 = vsyncadd %s283, %s288
          %s290 = smul.addr %s35, 4
          %s291 = smul.addr %s290, 128
          %s292 = scalar_lea.hbm %s2, %s291
          %s293 = sshll.u32 %s286, 4
          %s294 = int_to_ptr.vmem [resolvable:$true] %s293
          %299 = dma.hbm_to_vmem [thread:$0]  %s292, 512, %s294, %s283, 128, 128, 8
        $region28: #{tpu_custom_call.1} parent=15 // pred_fallthru
          _
        // Predicated region
        $region29: #{tpu_custom_call.1} parent=15 // pred_check
          %p300 = pneg %p137
        $region30: #{tpu_custom_call.1} parent=15 // pred_check_branch
          %302 = sbr.rel (%p300) target = $region32
        $region31: #{tpu_custom_call.1} parent=15 // pred_region
          %s303 = sand.u32 %s27, 1
          %s304 = scalar_lea.sflag [#allocation10], %s303
          %s305 = sand.u32 %s127, 1
          %s306 = smul.addr %s305, 32
          %s307 = scalar_lea.vmem [#allocation9], %s306
          %s309 = ssub.s32 512, 512
          %310 = vsyncadd %s304, %s309
          %s311 = smul.addr %s35, 4
          %s312 = smul.addr %s311, 128
          %s313 = scalar_lea.hbm %s3, %s312
          %s314 = sshll.u32 %s307, 4
          %s315 = int_to_ptr.vmem [resolvable:$true] %s314
          %320 = dma.hbm_to_vmem [thread:$0]  %s313, 512, %s315, %s304, 128, 128, 8
        $region32: #{tpu_custom_call.1} parent=15 // pred_fallthru
          _
        // Predicated region
        $region33: #{tpu_custom_call.1} parent=15 // pred_check
          %p321 = pneg %p163
        $region34: #{tpu_custom_call.1} parent=15 // pred_check_branch
          %323 = sbr.rel (%p321) target = $region36
        $region35: #{tpu_custom_call.1} parent=15 // pred_region
          %s324 = sand.u32 %s27, 1
          %s325 = scalar_lea.sflag [#allocation10], %s324
          %s326 = sand.u32 %s153, 1
          %s327 = smul.addr %s326, 64
          %s328 = scalar_lea.vmem [#allocation11], %s327
          %s330 = ssub.s32 1024, 1024
          %331 = vsyncadd %s325, %s330
          %s332 = smul.addr %s35, 8
          %s333 = smul.addr %s332, 128
          %s334 = scalar_lea.hbm %s4, %s333
          %s335 = sshll.u32 %s328, 4
          %s336 = int_to_ptr.vmem [resolvable:$true] %s335
          %341 = dma.hbm_to_vmem [thread:$0]  %s334, 1024, %s336, %s325, 128, 128, 8
        $region36: #{tpu_custom_call.1} parent=15 // pred_fallthru
          _
        // Predicated region
        $region37: #{tpu_custom_call.1} parent=15 // pred_check
          %p342 = pneg %p189
        $region38: #{tpu_custom_call.1} parent=15 // pred_check_branch
          %344 = sbr.rel (%p342) target = $region40
        $region39: #{tpu_custom_call.1} parent=15 // pred_region
          %s345 = sand.u32 %s179, 1
          %s346 = scalar_lea.sflag [#allocation13], %s345
          %s347 = sand.u32 %s179, 1
          %s348 = smul.addr %s347, 8
          %s349 = scalar_lea.vmem [#allocation12], %s348
          %s351 = ssub.s32 128, 128
          %352 = vsyncadd %s346, %s351
          %s353 = smul.addr %s35, 128
          %s354 = scalar_lea.hbm %s5, %s353
          %s356 = sshll.u32 %s349, 4
          %s357 = int_to_ptr.vmem [resolvable:$true] %s356
          %359 = dma.hbm_to_vmem [thread:$0]  %s354, 128, %s357, %s346
        $region40: #{tpu_custom_call.1} parent=15 // pred_fallthru
          _
      $region16: #{tpu_custom_call.1} parent=5 // pred_fallthru
        _
      %p360 = scmp.le.s32.totalorder 1, %s27
      %p361 = scmp.lt.s32.totalorder %s27, 5
      %p362 = pnand %p360, %p361
      %p363 = pneg %p362
      // Predicated region
      $region41: #{tpu_custom_call.1} parent=5 // pred_check
        _
      $region42: #{tpu_custom_call.1} parent=5 // pred_check_branch
        %365 = sbr.rel (%p362) target = $region44
      $region43: #{tpu_custom_call.1} parent=5 // pred_region
        %s366 = ssub.s32 %s27, 1
        %s367 = sand.u32 %s52, 1
        %s368 = scalar_lea.sflag [#allocation4], %s367
        %s369 = sand.u32 %s52, 1
        %s370 = smul.addr %s369, 8
        %s371 = scalar_lea.vmem [#allocation3], %s370
        // Predicated region
        $region45: #{tpu_custom_call.1} parent=43 // pred_check
          %p372 = pneg %p65
        $region46: #{tpu_custom_call.1} parent=43 // pred_check_branch
          %374 = sbr.rel (%p372) target = $region48
        $region47: #{tpu_custom_call.1} parent=43 // pred_region
          %375 = dma.done %s368, 128
        $region48: #{tpu_custom_call.1} parent=43 // pred_fallthru
          _
        %s376 = sand.u32 %s32, 1
        %s377 = scalar_lea.sflag [#allocation7], %s376
        %s378 = sand.u32 %s78, 1
        %s379 = smul.addr %s378, 32
        %s380 = scalar_lea.vmem [#allocation6], %s379
        // Predicated region
        $region49: #{tpu_custom_call.1} parent=43 // pred_check
          %p381 = pneg %p91
        $region50: #{tpu_custom_call.1} parent=43 // pred_check_branch
          %383 = sbr.rel (%p381) target = $region52
        $region51: #{tpu_custom_call.1} parent=43 // pred_region
          %384 = dma.done %s377, 512
        $region52: #{tpu_custom_call.1} parent=43 // pred_fallthru
          _
        %s385 = sand.u32 %s32, 1
        %s386 = scalar_lea.sflag [#allocation7], %s385
        %s387 = sand.u32 %s104, 1
        %s388 = smul.addr %s387, 32
        %s389 = scalar_lea.vmem [#allocation8], %s388
        // Predicated region
        $region53: #{tpu_custom_call.1} parent=43 // pred_check
          %p390 = pneg %p117
        $region54: #{tpu_custom_call.1} parent=43 // pred_check_branch
          %392 = sbr.rel (%p390) target = $region56
        $region55: #{tpu_custom_call.1} parent=43 // pred_region
          %393 = dma.done %s386, 512
        $region56: #{tpu_custom_call.1} parent=43 // pred_fallthru
          _
        %s394 = sand.u32 %s32, 1
        %s395 = scalar_lea.sflag [#allocation10], %s394
        %s396 = sand.u32 %s130, 1
        %s397 = smul.addr %s396, 32
        %s398 = scalar_lea.vmem [#allocation9], %s397
        // Predicated region
        $region57: #{tpu_custom_call.1} parent=43 // pred_check
          %p399 = pneg %p143
        $region58: #{tpu_custom_call.1} parent=43 // pred_check_branch
          %401 = sbr.rel (%p399) target = $region60
        $region59: #{tpu_custom_call.1} parent=43 // pred_region
          %402 = dma.done %s395, 512
        $region60: #{tpu_custom_call.1} parent=43 // pred_fallthru
          _
        %s403 = sand.u32 %s32, 1
        %s404 = scalar_lea.sflag [#allocation10], %s403
        %s405 = sand.u32 %s156, 1
        %s406 = smul.addr %s405, 64
        %s407 = scalar_lea.vmem [#allocation11], %s406
        // Predicated region
        $region61: #{tpu_custom_call.1} parent=43 // pred_check
          %p408 = pneg %p169
        $region62: #{tpu_custom_call.1} parent=43 // pred_check_branch
          %410 = sbr.rel (%p408) target = $region64
        $region63: #{tpu_custom_call.1} parent=43 // pred_region
          %411 = dma.done %s404, 1024
        $region64: #{tpu_custom_call.1} parent=43 // pred_fallthru
          _
        %s412 = sand.u32 %s182, 1
        %s413 = scalar_lea.sflag [#allocation13], %s412
        %s414 = sand.u32 %s182, 1
        %s415 = smul.addr %s414, 8
        %s416 = scalar_lea.vmem [#allocation12], %s415
        // Predicated region
        $region65: #{tpu_custom_call.1} parent=43 // pred_check
          %p417 = pneg %p195
        $region66: #{tpu_custom_call.1} parent=43 // pred_check_branch
          %419 = sbr.rel (%p417) target = $region68
        $region67: #{tpu_custom_call.1} parent=43 // pred_region
          %420 = dma.done %s413, 128
        $region68: #{tpu_custom_call.1} parent=43 // pred_fallthru
          _
        %s421 = sand.u32 %s52, 1
        %s422 = scalar_lea.sflag [#allocation4], %s421
        %s423 = sand.u32 %s52, 1
        %s424 = smul.addr %s423, 8
        %s425 = scalar_lea.vmem [#allocation3], %s424
        %p426 = pneg %p65
        %p427 = pneg %p62
        %s428 = sand.u32 %s32, 1
        %s429 = scalar_lea.sflag [#allocation7], %s428
        %s430 = sand.u32 %s78, 1
        %s431 = smul.addr %s430, 32
        %s432 = scalar_lea.vmem [#allocation6], %s431
        %p433 = pneg %p91
        %p434 = pneg %p88
        %s435 = sand.u32 %s32, 1
        %s436 = scalar_lea.sflag [#allocation7], %s435
        %s437 = sand.u32 %s104, 1
        %s438 = smul.addr %s437, 32
        %s439 = scalar_lea.vmem [#allocation8], %s438
        %p440 = pneg %p117
        %p441 = pneg %p114
        %s442 = sand.u32 %s32, 1
        %s443 = scalar_lea.sflag [#allocation10], %s442
        %s444 = sand.u32 %s130, 1
        %s445 = smul.addr %s444, 32
        %s446 = scalar_lea.vmem [#allocation9], %s445
        %p447 = pneg %p143
        %p448 = pneg %p140
        %s449 = sand.u32 %s32, 1
        %s450 = scalar_lea.sflag [#allocation10], %s449
        %s451 = sand.u32 %s156, 1
        %s452 = smul.addr %s451, 64
        %s453 = scalar_lea.vmem [#allocation11], %s452
        %p454 = pneg %p169
        %p455 = pneg %p166
        %s456 = sand.u32 %s182, 1
        %s457 = scalar_lea.sflag [#allocation13], %s456
        %s458 = sand.u32 %s182, 1
        %s459 = smul.addr %s458, 8
        %s460 = scalar_lea.vmem [#allocation12], %s459
        %p461 = pneg %p195
        %p462 = pneg %p192
        %p463 = pneg %p221
        %p464 = pneg %p218
        %s465 = sand.u32 %s208, 1
        %s466 = scalar_lea.sflag [#allocation5], %s465
        %s467 = sand.u32 %s208, 1
        %s468 = smul.addr %s467, 8
        %s469 = scalar_lea.vmem [#allocation14], %s468
        %p470 = scmp.eq.s32.totalorder %s37, 0
        // Predicated region
        $region69: #{tpu_custom_call.1} parent=43 // pred_check
          %p471 = pneg %p470
        $region70: #{tpu_custom_call.1} parent=43 // pred_check_branch
          %473 = sbr.rel (%p471) target = $region72
        $region71: #{tpu_custom_call.1} parent=43 // pred_region
          %v474 = vld [vmem:[%s371] sm:$0xff]
          %vm475 = vcmask 261120
          %476 = vst.msk [vmem:[#allocation2] sm:$0xff] %vm475, %v474
        $region72: #{tpu_custom_call.1} parent=43 // pred_fallthru
          _
        %v477 = vld [vmem:[#allocation2] sm:$0xff]
        %v478 = vld [vmem:[%s380] sm:$0xff]
        %v479 = vld [vmem:[%s380 + $0x8] sm:$0xff]
        %v480 = vld [vmem:[%s380 + $0x10] sm:$0xff]
        %v481 = vld [vmem:[%s380 + $0x18] sm:$0xff]
        %v482 = vld [vmem:[%s389] sm:$0xff]
        %v483 = vld [vmem:[%s389 + $0x8] sm:$0xff]
        %v484 = vld [vmem:[%s389 + $0x10] sm:$0xff]
        %v485 = vld [vmem:[%s389 + $0x18] sm:$0xff]
        %v486 = vld [vmem:[%s398] sm:$0xff]
        %v487 = vld [vmem:[%s398 + $0x8] sm:$0xff]
        %v488 = vld [vmem:[%s398 + $0x10] sm:$0xff]
        %v489 = vld [vmem:[%s398 + $0x18] sm:$0xff]
        %v490 = vld [vmem:[%s407] sm:$0xff]
        %v491 = vld [vmem:[%s407 + $0x8] sm:$0xff]
        %v492 = vld [vmem:[%s407 + $0x10] sm:$0xff]
        %v493 = vld [vmem:[%s407 + $0x18] sm:$0xff]
        %v494 = vld [vmem:[%s407 + $0x20] sm:$0xff]
        %v495 = vld [vmem:[%s407 + $0x28] sm:$0xff]
        %v496 = vld [vmem:[%s407 + $0x30] sm:$0xff]
        %v497 = vld [vmem:[%s407 + $0x38] sm:$0xff]
        %v498 = vld [vmem:[%s416] sm:$0xff]
        %v499 = vlaneseq
        %v500 = vshrl.u32 %v499, 7
        %v501 = vsub.s32 0, %v500
        %v502 = vrot.slane %v498, %v501
        %vm503 = vcmask 261120
        %v505 = vsel %vm503, %v477, 0
        %507 = vmatprep.subr.mxu0 0.0
        %508 = vmatpush1.msra.mxu0 %v478
        %509 = vmatprep.subr.mxu0 0.0
        %510 = vmatpush1.msra.mxu0 %v479
        %511 = vmatprep.subr.mxu0 0.0
        %512 = vmatpush1.msra.mxu0 %v480
        %513 = vmatprep.subr.mxu0 0.0
        %514 = vmatpush1.msra.mxu0 %v481
        %515 = vmatprep.subr.mxu0 0.0
        %516 = vmatpush1.msra.mxu0 0.0
        %517 = vmatprep.subr.mxu0 0.0
        %518 = vmatpush1.msra.mxu0 0.0
        %519 = vmatprep.subr.mxu0 0.0
        %520 = vmatpush1.msra.mxu0 0.0
        %521 = vmatprep.subr.mxu0 0.0
        %522 = vmatpush1.msra.mxu0 0.0
        %523 = vmatprep.subr.mxu0 0.0
        %524 = vmatpush1.msra.mxu0 0.0
        %525 = vmatprep.subr.mxu0 0.0
        %526 = vmatpush1.msra.mxu0 0.0
        %527 = vmatprep.subr.mxu0 0.0
        %528 = vmatpush1.msra.mxu0 0.0
        %529 = vmatprep.subr.mxu0 0.0
        %530 = vmatpush1.msra.mxu0 0.0
        %531 = vmatprep.subr.mxu0 0.0
        %532 = vmatpush1.msra.mxu0 0.0
        %533 = vmatprep.subr.mxu0 0.0
        %534 = vmatpush1.msra.mxu0 0.0
        %535 = vmatprep.subr.mxu0 0.0
        %536 = vmatpush1.msra.mxu0 0.0
        %537 = vmatprep.subr.mxu0 0.0
        %538 = vmatpush1.msra.mxu0 0.0
        %539 = vmatprep.subr.mxu0 0.0
        %540 = vmatpush1.msra.mxu0 0.0
        %541 = vmatprep.subr.mxu0 0.0
        %542 = vmatpush1.msra.mxu0 0.0
        %543 = vmatprep.subr.mxu0 0.0
        %544 = vmatpush1.msra.mxu0 0.0
        %545 = vmatprep.subr.mxu0 0.0
        %546 = vmatpush1.msra.mxu0 0.0
        %547 = vmatprep.subr.mxu0 0.0
        %548 = vmatpush1.msra.mxu0 0.0
        %549 = vmatprep.subr.mxu0 0.0
        %550 = vmatpush1.msra.mxu0 0.0
        %551 = vmatprep.subr.mxu0 0.0
        %552 = vmatpush1.msra.mxu0 0.0
        %553 = vmatprep.subr.mxu0 0.0
        %554 = vmatpush1.msra.mxu0 0.0
        %555 = vmatprep.subr.mxu0 0.0
        %556 = vmatpush1.msra.mxu0 0.0
        %557 = vmatprep.subr.mxu0 0.0
        %558 = vmatpush1.msra.mxu0 0.0
        %559 = vmatprep.subr.mxu0 0.0
        %560 = vmatpush1.msra.mxu0 0.0
        %561 = vmatprep.subr.mxu0 0.0
        %562 = vmatpush1.msra.mxu0 0.0
        %563 = vmatprep.subr.mxu0 0.0
        %564 = vmatpush1.msra.mxu0 0.0
        %565 = vmatprep.subr.mxu0 0.0
        %566 = vmatpush1.msra.mxu0 0.0
        %567 = vmatprep.subr.mxu0 0.0
        %568 = vmatpush1.msra.mxu0 0.0
        %569 = vmatprep.subr.mxu0 0.0
        %570 = vmatpush1.msra.mxu0 0.0
        %571 = vmatprep.mubr.f32.mxu0 0.0
        %572 = vmatmul.mubr.f32.gmra.mrb[0].mxu0 %v505
        %v573 = vpop.f32.mrb[0].mxu0
        %v574 = vadd.f32 %v502, %v573
        %v575 = vpop.f32.mrb[0].mxu0
        %576 = vdwg.mxu0
        %578 = vrot.lane.b32.xlu0 %v574, 96
        %v579 = vpop.permute.xlu0 %578
        %vm580 = vcmask 31744
        %v581 = vsel %vm580, %v574, 0
        %v583 = vsel %vm580, %v579, 0
        %585 = vmatprep.subr.mxu0 0.0
        %586 = vmatpush1.xpose.msra.mxu0 %v583
        %587 = vmatprep.subr.mxu0 0.0
        %588 = vmatpush1.xpose.msra.mxu0 0.0
        %589 = vmatprep.subr.mxu0 0.0
        %590 = vmatpush1.xpose.msra.mxu0 0.0
        %591 = vmatprep.subr.mxu0 0.0
        %592 = vmatpush1.xpose.msra.mxu0 0.0
        %593 = vmatprep.subr.mxu0 0.0
        %594 = vmatpush1.xpose.msra.mxu0 0.0
        %595 = vmatprep.subr.mxu0 0.0
        %596 = vmatpush1.xpose.msra.mxu0 0.0
        %597 = vmatprep.subr.mxu0 0.0
        %598 = vmatpush1.xpose.msra.mxu0 0.0
        %599 = vmatprep.subr.mxu0 0.0
        %600 = vmatpush1.xpose.msra.mxu0 0.0
        %601 = vmatprep.subr.mxu0 0.0
        %602 = vmatpush1.xpose.msra.mxu0 0.0
        %603 = vmatprep.subr.mxu0 0.0
        %604 = vmatpush1.xpose.msra.mxu0 0.0
        %605 = vmatprep.subr.mxu0 0.0
        %606 = vmatpush1.xpose.msra.mxu0 0.0
        %607 = vmatprep.subr.mxu0 0.0
        %608 = vmatpush1.xpose.msra.mxu0 0.0
        %609 = vmatprep.subr.mxu0 0.0
        %610 = vmatpush1.xpose.msra.mxu0 0.0
        %611 = vmatprep.subr.mxu0 0.0
        %612 = vmatpush1.xpose.msra.mxu0 0.0
        %613 = vmatprep.subr.mxu0 0.0
        %614 = vmatpush1.xpose.msra.mxu0 0.0
        %615 = vmatprep.subr.mxu0 0.0
        %616 = vmatpush1.xpose.msra.mxu0 0.0
        %617 = vmatprep.subr.mxu0 0.0
        %618 = vmatpush1.xpose.msra.mxu0 0.0
        %619 = vmatprep.subr.mxu0 0.0
        %620 = vmatpush1.xpose.msra.mxu0 0.0
        %621 = vmatprep.subr.mxu0 0.0
        %622 = vmatpush1.xpose.msra.mxu0 0.0
        %623 = vmatprep.subr.mxu0 0.0
        %624 = vmatpush1.xpose.msra.mxu0 0.0
        %625 = vmatprep.subr.mxu0 0.0
        %626 = vmatpush1.xpose.msra.mxu0 0.0
        %627 = vmatprep.subr.mxu0 0.0
        %628 = vmatpush1.xpose.msra.mxu0 0.0
        %629 = vmatprep.subr.mxu0 0.0
        %630 = vmatpush1.xpose.msra.mxu0 0.0
        %631 = vmatprep.subr.mxu0 0.0
        %632 = vmatpush1.xpose.msra.mxu0 0.0
        %633 = vmatprep.subr.mxu0 0.0
        %634 = vmatpush1.xpose.msra.mxu0 0.0
        %635 = vmatprep.subr.mxu0 0.0
        %636 = vmatpush1.xpose.msra.mxu0 0.0
        %637 = vmatprep.subr.mxu0 0.0
        %638 = vmatpush1.xpose.msra.mxu0 0.0
        %639 = vmatprep.subr.mxu0 0.0
        %640 = vmatpush1.xpose.msra.mxu0 0.0
        %641 = vmatprep.subr.mxu0 0.0
        %642 = vmatpush1.xpose.msra.mxu0 0.0
        %643 = vmatprep.subr.mxu0 0.0
        %644 = vmatpush1.xpose.msra.mxu0 0.0
        %645 = vmatprep.subr.mxu0 0.0
        %646 = vmatpush1.xpose.msra.mxu0 0.0
        %647 = vmatprep.subr.mxu0 0.0
        %648 = vmatpush1.xpose.msra.mxu0 0.0
        %649 = vmatprep.mubr.f32.mxu0 0.0
        %650 = vmatmul.mubr.f32.gmra.mrb[0].mxu0 %v581
        %v651 = vpop.f32.mrb[0].mxu0
        %v652 = vadd.f32 0.0, %v651
        %v653 = vpop.f32.mrb[0].mxu0
        %654 = vdwg.mxu0
        %vm655 = vcmask 64512
        %v656 = vsel %vm655, %v652, -inf
        %657 = vmax.xlane.f32.xlu0 %v656
        %v658 = vpop.xlane.xlu0 %657
        %v659 = vsub.f32 %v652, %v658
        %v660 = vmul.f32 %v659, 1.442695
        %v661 = vpow.pop %v660
        %v662 = vsel %vm655, %v661, 0.0
        %663 = vadd.xlane.f32.xlu0 %v662
        %v664 = vpop.xlane.xlu0 %663
        %v665 = vrcp.pop %v664
        %v666 = vmul.f32 %v661, %v665
        %667 = vrot.lane.b32.xlu0 %v574, 64
        %v668 = vpop.permute.xlu0 %667
        %v671 = vsel %vm655, %v666, 0
        %673 = vmatprep.subr.mxu0 0.0
        %674 = vmatpush1.msra.mxu0 %v668
        %675 = vmatprep.subr.mxu0 0.0
        %676 = vmatpush1.msra.mxu0 0.0
        %677 = vmatprep.subr.mxu0 0.0
        %678 = vmatpush1.msra.mxu0 0.0
        %679 = vmatprep.subr.mxu0 0.0
        %680 = vmatpush1.msra.mxu0 0.0
        %681 = vmatprep.subr.mxu0 0.0
        %682 = vmatpush1.msra.mxu0 0.0
        %683 = vmatprep.subr.mxu0 0.0
        %684 = vmatpush1.msra.mxu0 0.0
        %685 = vmatprep.subr.mxu0 0.0
        %686 = vmatpush1.msra.mxu0 0.0
        %687 = vmatprep.subr.mxu0 0.0
        %688 = vmatpush1.msra.mxu0 0.0
        %689 = vmatprep.subr.mxu0 0.0
        %690 = vmatpush1.msra.mxu0 0.0
        %691 = vmatprep.subr.mxu0 0.0
        %692 = vmatpush1.msra.mxu0 0.0
        %693 = vmatprep.subr.mxu0 0.0
        %694 = vmatpush1.msra.mxu0 0.0
        %695 = vmatprep.subr.mxu0 0.0
        %696 = vmatpush1.msra.mxu0 0.0
        %697 = vmatprep.subr.mxu0 0.0
        %698 = vmatpush1.msra.mxu0 0.0
        %699 = vmatprep.subr.mxu0 0.0
        %700 = vmatpush1.msra.mxu0 0.0
        %701 = vmatprep.subr.mxu0 0.0
        %702 = vmatpush1.msra.mxu0 0.0
        %703 = vmatprep.subr.mxu0 0.0
        %704 = vmatpush1.msra.mxu0 0.0
        %705 = vmatprep.subr.mxu0 0.0
        %706 = vmatpush1.msra.mxu0 0.0
        %707 = vmatprep.subr.mxu0 0.0
        %708 = vmatpush1.msra.mxu0 0.0
        %709 = vmatprep.subr.mxu0 0.0
        %710 = vmatpush1.msra.mxu0 0.0
        %711 = vmatprep.subr.mxu0 0.0
        %712 = vmatpush1.msra.mxu0 0.0
        %713 = vmatprep.subr.mxu0 0.0
        %714 = vmatpush1.msra.mxu0 0.0
        %715 = vmatprep.subr.mxu0 0.0
        %716 = vmatpush1.msra.mxu0 0.0
        %717 = vmatprep.subr.mxu0 0.0
        %718 = vmatpush1.msra.mxu0 0.0
        %719 = vmatprep.subr.mxu0 0.0
        %720 = vmatpush1.msra.mxu0 0.0
        %721 = vmatprep.subr.mxu0 0.0
        %722 = vmatpush1.msra.mxu0 0.0
        %723 = vmatprep.subr.mxu0 0.0
        %724 = vmatpush1.msra.mxu0 0.0
        %725 = vmatprep.subr.mxu0 0.0
        %726 = vmatpush1.msra.mxu0 0.0
        %727 = vmatprep.subr.mxu0 0.0
        %728 = vmatpush1.msra.mxu0 0.0
        %729 = vmatprep.subr.mxu0 0.0
        %730 = vmatpush1.msra.mxu0 0.0
        %731 = vmatprep.subr.mxu0 0.0
        %732 = vmatpush1.msra.mxu0 0.0
        %733 = vmatprep.subr.mxu0 0.0
        %734 = vmatpush1.msra.mxu0 0.0
        %735 = vmatprep.subr.mxu0 0.0
        %736 = vmatpush1.msra.mxu0 0.0
        %737 = vmatprep.mubr.f32.mxu0 0.0
        %738 = vmatmul.mubr.f32.gmra.mrb[0].mxu0 %v671
        %v739 = vpop.f32.mrb[0].mxu0
        %v740 = vadd.f32 0.0, %v739
        %v741 = vpop.f32.mrb[0].mxu0
        %742 = vdwg.mxu0
        %743 = vrot.lane.b32.xlu0 %v574, 124
        %v744 = vpop.permute.xlu0 %743
        %745 = vrot.lane.b32.xlu0 %v574, 92
        %v746 = vpop.permute.xlu0 %745
        %v747 = vsel %vm580, %v744, 0
        %v749 = vsel %vm580, %v746, 0
        %751 = vmatprep.subr.mxu0 0.0
        %752 = vmatpush1.xpose.msra.mxu0 %v749
        %753 = vmatprep.subr.mxu0 0.0
        %754 = vmatpush1.xpose.msra.mxu0 0.0
        %755 = vmatprep.subr.mxu0 0.0
        %756 = vmatpush1.xpose.msra.mxu0 0.0
        %757 = vmatprep.subr.mxu0 0.0
        %758 = vmatpush1.xpose.msra.mxu0 0.0
        %759 = vmatprep.subr.mxu0 0.0
        %760 = vmatpush1.xpose.msra.mxu0 0.0
        %761 = vmatprep.subr.mxu0 0.0
        %762 = vmatpush1.xpose.msra.mxu0 0.0
        %763 = vmatprep.subr.mxu0 0.0
        %764 = vmatpush1.xpose.msra.mxu0 0.0
        %765 = vmatprep.subr.mxu0 0.0
        %766 = vmatpush1.xpose.msra.mxu0 0.0
        %767 = vmatprep.subr.mxu0 0.0
        %768 = vmatpush1.xpose.msra.mxu0 0.0
        %769 = vmatprep.subr.mxu0 0.0
        %770 = vmatpush1.xpose.msra.mxu0 0.0
        %771 = vmatprep.subr.mxu0 0.0
        %772 = vmatpush1.xpose.msra.mxu0 0.0
        %773 = vmatprep.subr.mxu0 0.0
        %774 = vmatpush1.xpose.msra.mxu0 0.0
        %775 = vmatprep.subr.mxu0 0.0
        %776 = vmatpush1.xpose.msra.mxu0 0.0
        %777 = vmatprep.subr.mxu0 0.0
        %778 = vmatpush1.xpose.msra.mxu0 0.0
        %779 = vmatprep.subr.mxu0 0.0
        %780 = vmatpush1.xpose.msra.mxu0 0.0
        %781 = vmatprep.subr.mxu0 0.0
        %782 = vmatpush1.xpose.msra.mxu0 0.0
        %783 = vmatprep.subr.mxu0 0.0
        %784 = vmatpush1.xpose.msra.mxu0 0.0
        %785 = vmatprep.subr.mxu0 0.0
        %786 = vmatpush1.xpose.msra.mxu0 0.0
        %787 = vmatprep.subr.mxu0 0.0
        %788 = vmatpush1.xpose.msra.mxu0 0.0
        %789 = vmatprep.subr.mxu0 0.0
        %790 = vmatpush1.xpose.msra.mxu0 0.0
        %791 = vmatprep.subr.mxu0 0.0
        %792 = vmatpush1.xpose.msra.mxu0 0.0
        %793 = vmatprep.subr.mxu0 0.0
        %794 = vmatpush1.xpose.msra.mxu0 0.0
        %795 = vmatprep.subr.mxu0 0.0
        %796 = vmatpush1.xpose.msra.mxu0 0.0
        %797 = vmatprep.subr.mxu0 0.0
        %798 = vmatpush1.xpose.msra.mxu0 0.0
        %799 = vmatprep.subr.mxu0 0.0
        %800 = vmatpush1.xpose.msra.mxu0 0.0
        %801 = vmatprep.subr.mxu0 0.0
        %802 = vmatpush1.xpose.msra.mxu0 0.0
        %803 = vmatprep.subr.mxu0 0.0
        %804 = vmatpush1.xpose.msra.mxu0 0.0
        %805 = vmatprep.subr.mxu0 0.0
        %806 = vmatpush1.xpose.msra.mxu0 0.0
        %807 = vmatprep.subr.mxu0 0.0
        %808 = vmatpush1.xpose.msra.mxu0 0.0
        %809 = vmatprep.subr.mxu0 0.0
        %810 = vmatpush1.xpose.msra.mxu0 0.0
        %811 = vmatprep.subr.mxu0 0.0
        %812 = vmatpush1.xpose.msra.mxu0 0.0
        %813 = vmatprep.subr.mxu0 0.0
        %814 = vmatpush1.xpose.msra.mxu0 0.0
        %815 = vmatprep.mubr.f32.mxu0 0.0
        %816 = vmatmul.mubr.f32.gmra.mrb[0].mxu0 %v747
        %v817 = vpop.f32.mrb[0].mxu0
        %v818 = vadd.f32 0.0, %v817
        %v819 = vpop.f32.mrb[0].mxu0
        %820 = vdwg.mxu0
        %v821 = vsel %vm655, %v818, -inf
        %822 = vmax.xlane.f32.xlu0 %v821
        %v823 = vpop.xlane.xlu0 %822
        %v824 = vsub.f32 %v818, %v823
        %v825 = vmul.f32 %v824, 1.442695
        %v826 = vpow.pop %v825
        %v827 = vsel %vm655, %v826, 0.0
        %828 = vadd.xlane.f32.xlu0 %v827
        %v829 = vpop.xlane.xlu0 %828
        %v830 = vrcp.pop %v829
        %v831 = vmul.f32 %v826, %v830
        %832 = vrot.lane.b32.xlu0 %v574, 60
        %v833 = vpop.permute.xlu0 %832
        %v836 = vsel %vm655, %v831, 0
        %838 = vmatprep.subr.mxu0 0.0
        %839 = vmatpush1.msra.mxu0 %v833
        %840 = vmatprep.subr.mxu0 0.0
        %841 = vmatpush1.msra.mxu0 0.0
        %842 = vmatprep.subr.mxu0 0.0
        %843 = vmatpush1.msra.mxu0 0.0
        %844 = vmatprep.subr.mxu0 0.0
        %845 = vmatpush1.msra.mxu0 0.0
        %846 = vmatprep.subr.mxu0 0.0
        %847 = vmatpush1.msra.mxu0 0.0
        %848 = vmatprep.subr.mxu0 0.0
        %849 = vmatpush1.msra.mxu0 0.0
        %850 = vmatprep.subr.mxu0 0.0
        %851 = vmatpush1.msra.mxu0 0.0
        %852 = vmatprep.subr.mxu0 0.0
        %853 = vmatpush1.msra.mxu0 0.0
        %854 = vmatprep.subr.mxu0 0.0
        %855 = vmatpush1.msra.mxu0 0.0
        %856 = vmatprep.subr.mxu0 0.0
        %857 = vmatpush1.msra.mxu0 0.0
        %858 = vmatprep.subr.mxu0 0.0
        %859 = vmatpush1.msra.mxu0 0.0
        %860 = vmatprep.subr.mxu0 0.0
        %861 = vmatpush1.msra.mxu0 0.0
        %862 = vmatprep.subr.mxu0 0.0
        %863 = vmatpush1.msra.mxu0 0.0
        %864 = vmatprep.subr.mxu0 0.0
        %865 = vmatpush1.msra.mxu0 0.0
        %866 = vmatprep.subr.mxu0 0.0
        %867 = vmatpush1.msra.mxu0 0.0
        %868 = vmatprep.subr.mxu0 0.0
        %869 = vmatpush1.msra.mxu0 0.0
        %870 = vmatprep.subr.mxu0 0.0
        %871 = vmatpush1.msra.mxu0 0.0
        %872 = vmatprep.subr.mxu0 0.0
        %873 = vmatpush1.msra.mxu0 0.0
        %874 = vmatprep.subr.mxu0 0.0
        %875 = vmatpush1.msra.mxu0 0.0
        %876 = vmatprep.subr.mxu0 0.0
        %877 = vmatpush1.msra.mxu0 0.0
        %878 = vmatprep.subr.mxu0 0.0
        %879 = vmatpush1.msra.mxu0 0.0
        %880 = vmatprep.subr.mxu0 0.0
        %881 = vmatpush1.msra.mxu0 0.0
        %882 = vmatprep.subr.mxu0 0.0
        %883 = vmatpush1.msra.mxu0 0.0
        %884 = vmatprep.subr.mxu0 0.0
        %885 = vmatpush1.msra.mxu0 0.0
        %886 = vmatprep.subr.mxu0 0.0
        %887 = vmatpush1.msra.mxu0 0.0
        %888 = vmatprep.subr.mxu0 0.0
        %889 = vmatpush1.msra.mxu0 0.0
        %890 = vmatprep.subr.mxu0 0.0
        %891 = vmatpush1.msra.mxu0 0.0
        %892 = vmatprep.subr.mxu0 0.0
        %893 = vmatpush1.msra.mxu0 0.0
        %894 = vmatprep.subr.mxu0 0.0
        %895 = vmatpush1.msra.mxu0 0.0
        %896 = vmatprep.subr.mxu0 0.0
        %897 = vmatpush1.msra.mxu0 0.0
        %898 = vmatprep.subr.mxu0 0.0
        %899 = vmatpush1.msra.mxu0 0.0
        %900 = vmatprep.subr.mxu0 0.0
        %901 = vmatpush1.msra.mxu0 0.0
        %902 = vmatprep.mubr.f32.mxu0 0.0
        %903 = vmatmul.mubr.f32.gmra.mrb[0].mxu0 %v836
        %v904 = vpop.f32.mrb[0].mxu0
        %v905 = vadd.f32 0.0, %v904
        %v906 = vpop.f32.mrb[0].mxu0
        %907 = vdwg.mxu0
        %908 = vrot.lane.b32.xlu0 %v574, 120
        %v909 = vpop.permute.xlu0 %908
        %910 = vrot.lane.b32.xlu0 %v574, 88
        %v911 = vpop.permute.xlu0 %910
        %v912 = vsel %vm580, %v909, 0
        %v914 = vsel %vm580, %v911, 0
        %916 = vmatprep.subr.mxu0 0.0
        %917 = vmatpush1.xpose.msra.mxu0 %v914
        %918 = vmatprep.subr.mxu0 0.0
        %919 = vmatpush1.xpose.msra.mxu0 0.0
        %920 = vmatprep.subr.mxu0 0.0
        %921 = vmatpush1.xpose.msra.mxu0 0.0
        %922 = vmatprep.subr.mxu0 0.0
        %923 = vmatpush1.xpose.msra.mxu0 0.0
        %924 = vmatprep.subr.mxu0 0.0
        %925 = vmatpush1.xpose.msra.mxu0 0.0
        %926 = vmatprep.subr.mxu0 0.0
        %927 = vmatpush1.xpose.msra.mxu0 0.0
        %928 = vmatprep.subr.mxu0 0.0
        %929 = vmatpush1.xpose.msra.mxu0 0.0
        %930 = vmatprep.subr.mxu0 0.0
        %931 = vmatpush1.xpose.msra.mxu0 0.0
        %932 = vmatprep.subr.mxu0 0.0
        %933 = vmatpush1.xpose.msra.mxu0 0.0
        %934 = vmatprep.subr.mxu0 0.0
        %935 = vmatpush1.xpose.msra.mxu0 0.0
        %936 = vmatprep.subr.mxu0 0.0
        %937 = vmatpush1.xpose.msra.mxu0 0.0
        %938 = vmatprep.subr.mxu0 0.0
        %939 = vmatpush1.xpose.msra.mxu0 0.0
        %940 = vmatprep.subr.mxu0 0.0
        %941 = vmatpush1.xpose.msra.mxu0 0.0
        %942 = vmatprep.subr.mxu0 0.0
        %943 = vmatpush1.xpose.msra.mxu0 0.0
        %944 = vmatprep.subr.mxu0 0.0
        %945 = vmatpush1.xpose.msra.mxu0 0.0
        %946 = vmatprep.subr.mxu0 0.0
        %947 = vmatpush1.xpose.msra.mxu0 0.0
        %948 = vmatprep.subr.mxu0 0.0
        %949 = vmatpush1.xpose.msra.mxu0 0.0
        %950 = vmatprep.subr.mxu0 0.0
        %951 = vmatpush1.xpose.msra.mxu0 0.0
        %952 = vmatprep.subr.mxu0 0.0
        %953 = vmatpush1.xpose.msra.mxu0 0.0
        %954 = vmatprep.subr.mxu0 0.0
        %955 = vmatpush1.xpose.msra.mxu0 0.0
        %956 = vmatprep.subr.mxu0 0.0
        %957 = vmatpush1.xpose.msra.mxu0 0.0
        %958 = vmatprep.subr.mxu0 0.0
        %959 = vmatpush1.xpose.msra.mxu0 0.0
        %960 = vmatprep.subr.mxu0 0.0
        %961 = vmatpush1.xpose.msra.mxu0 0.0
        %962 = vmatprep.subr.mxu0 0.0
        %963 = vmatpush1.xpose.msra.mxu0 0.0
        %964 = vmatprep.subr.mxu0 0.0
        %965 = vmatpush1.xpose.msra.mxu0 0.0
        %966 = vmatprep.subr.mxu0 0.0
        %967 = vmatpush1.xpose.msra.mxu0 0.0
        %968 = vmatprep.subr.mxu0 0.0
        %969 = vmatpush1.xpose.msra.mxu0 0.0
        %970 = vmatprep.subr.mxu0 0.0
        %971 = vmatpush1.xpose.msra.mxu0 0.0
        %972 = vmatprep.subr.mxu0 0.0
        %973 = vmatpush1.xpose.msra.mxu0 0.0
        %974 = vmatprep.subr.mxu0 0.0
        %975 = vmatpush1.xpose.msra.mxu0 0.0
        %976 = vmatprep.subr.mxu0 0.0
        %977 = vmatpush1.xpose.msra.mxu0 0.0
        %978 = vmatprep.subr.mxu0 0.0
        %979 = vmatpush1.xpose.msra.mxu0 0.0
        %980 = vmatprep.mubr.f32.mxu0 0.0
        %981 = vmatmul.mubr.f32.gmra.mrb[0].mxu0 %v912
        %v982 = vpop.f32.mrb[0].mxu0
        %v983 = vadd.f32 0.0, %v982
        %v984 = vpop.f32.mrb[0].mxu0
        %985 = vdwg.mxu0
        %v986 = vsel %vm655, %v983, -inf
        %987 = vmax.xlane.f32.xlu0 %v986
        %v988 = vpop.xlane.xlu0 %987
        %v989 = vsub.f32 %v983, %v988
        %v990 = vmul.f32 %v989, 1.442695
        %v991 = vpow.pop %v990
        %v992 = vsel %vm655, %v991, 0.0
        %993 = vadd.xlane.f32.xlu0 %v992
        %v994 = vpop.xlane.xlu0 %993
        %v995 = vrcp.pop %v994
        %v996 = vmul.f32 %v991, %v995
        %997 = vrot.lane.b32.xlu0 %v574, 56
        %v998 = vpop.permute.xlu0 %997
        %v1001 = vsel %vm655, %v996, 0
        %1003 = vmatprep.subr.mxu0 0.0
        %1004 = vmatpush1.msra.mxu0 %v998
        %1005 = vmatprep.subr.mxu0 0.0
        %1006 = vmatpush1.msra.mxu0 0.0
        %1007 = vmatprep.subr.mxu0 0.0
        %1008 = vmatpush1.msra.mxu0 0.0
        %1009 = vmatprep.subr.mxu0 0.0
        %1010 = vmatpush1.msra.mxu0 0.0
        %1011 = vmatprep.subr.mxu0 0.0
        %1012 = vmatpush1.msra.mxu0 0.0
        %1013 = vmatprep.subr.mxu0 0.0
        %1014 = vmatpush1.msra.mxu0 0.0
        %1015 = vmatprep.subr.mxu0 0.0
        %1016 = vmatpush1.msra.mxu0 0.0
        %1017 = vmatprep.subr.mxu0 0.0
        %1018 = vmatpush1.msra.mxu0 0.0
        %1019 = vmatprep.subr.mxu0 0.0
        %1020 = vmatpush1.msra.mxu0 0.0
        %1021 = vmatprep.subr.mxu0 0.0
        %1022 = vmatpush1.msra.mxu0 0.0
        %1023 = vmatprep.subr.mxu0 0.0
        %1024 = vmatpush1.msra.mxu0 0.0
        %1025 = vmatprep.subr.mxu0 0.0
        %1026 = vmatpush1.msra.mxu0 0.0
        %1027 = vmatprep.subr.mxu0 0.0
        %1028 = vmatpush1.msra.mxu0 0.0
        %1029 = vmatprep.subr.mxu0 0.0
        %1030 = vmatpush1.msra.mxu0 0.0
        %1031 = vmatprep.subr.mxu0 0.0
        %1032 = vmatpush1.msra.mxu0 0.0
        %1033 = vmatprep.subr.mxu0 0.0
        %1034 = vmatpush1.msra.mxu0 0.0
        %1035 = vmatprep.subr.mxu0 0.0
        %1036 = vmatpush1.msra.mxu0 0.0
        %1037 = vmatprep.subr.mxu0 0.0
        %1038 = vmatpush1.msra.mxu0 0.0
        %1039 = vmatprep.subr.mxu0 0.0
        %1040 = vmatpush1.msra.mxu0 0.0
        %1041 = vmatprep.subr.mxu0 0.0
        %1042 = vmatpush1.msra.mxu0 0.0
        %1043 = vmatprep.subr.mxu0 0.0
        %1044 = vmatpush1.msra.mxu0 0.0
        %1045 = vmatprep.subr.mxu0 0.0
        %1046 = vmatpush1.msra.mxu0 0.0
        %1047 = vmatprep.subr.mxu0 0.0
        %1048 = vmatpush1.msra.mxu0 0.0
        %1049 = vmatprep.subr.mxu0 0.0
        %1050 = vmatpush1.msra.mxu0 0.0
        %1051 = vmatprep.subr.mxu0 0.0
        %1052 = vmatpush1.msra.mxu0 0.0
        %1053 = vmatprep.subr.mxu0 0.0
        %1054 = vmatpush1.msra.mxu0 0.0
        %1055 = vmatprep.subr.mxu0 0.0
        %1056 = vmatpush1.msra.mxu0 0.0
        %1057 = vmatprep.subr.mxu0 0.0
        %1058 = vmatpush1.msra.mxu0 0.0
        %1059 = vmatprep.subr.mxu0 0.0
        %1060 = vmatpush1.msra.mxu0 0.0
        %1061 = vmatprep.subr.mxu0 0.0
        %1062 = vmatpush1.msra.mxu0 0.0
        %1063 = vmatprep.subr.mxu0 0.0
        %1064 = vmatpush1.msra.mxu0 0.0
        %1065 = vmatprep.subr.mxu0 0.0
        %1066 = vmatpush1.msra.mxu0 0.0
        %1067 = vmatprep.mubr.f32.mxu0 0.0
        %1068 = vmatmul.mubr.f32.gmra.mrb[0].mxu0 %v1001
        %v1069 = vpop.f32.mrb[0].mxu0
        %v1070 = vadd.f32 0.0, %v1069
        %v1071 = vpop.f32.mrb[0].mxu0
        %1072 = vdwg.mxu0
        %1073 = vrot.lane.b32.xlu0 %v574, 116
        %v1074 = vpop.permute.xlu0 %1073
        %1075 = vrot.lane.b32.xlu0 %v574, 84
        %v1076 = vpop.permute.xlu0 %1075
        %v1077 = vsel %vm580, %v1074, 0
        %v1079 = vsel %vm580, %v1076, 0
        %1081 = vmatprep.subr.mxu0 0.0
        %1082 = vmatpush1.xpose.msra.mxu0 %v1079
        %1083 = vmatprep.subr.mxu0 0.0
        %1084 = vmatpush1.xpose.msra.mxu0 0.0
        %1085 = vmatprep.subr.mxu0 0.0
        %1086 = vmatpush1.xpose.msra.mxu0 0.0
        %1087 = vmatprep.subr.mxu0 0.0
        %1088 = vmatpush1.xpose.msra.mxu0 0.0
        %1089 = vmatprep.subr.mxu0 0.0
        %1090 = vmatpush1.xpose.msra.mxu0 0.0
        %1091 = vmatprep.subr.mxu0 0.0
        %1092 = vmatpush1.xpose.msra.mxu0 0.0
        %1093 = vmatprep.subr.mxu0 0.0
        %1094 = vmatpush1.xpose.msra.mxu0 0.0
        %1095 = vmatprep.subr.mxu0 0.0
        %1096 = vmatpush1.xpose.msra.mxu0 0.0
        %1097 = vmatprep.subr.mxu0 0.0
        %1098 = vmatpush1.xpose.msra.mxu0 0.0
        %1099 = vmatprep.subr.mxu0 0.0
        %1100 = vmatpush1.xpose.msra.mxu0 0.0
        %1101 = vmatprep.subr.mxu0 0.0
        %1102 = vmatpush1.xpose.msra.mxu0 0.0
        %1103 = vmatprep.subr.mxu0 0.0
        %1104 = vmatpush1.xpose.msra.mxu0 0.0
        %1105 = vmatprep.subr.mxu0 0.0
        %1106 = vmatpush1.xpose.msra.mxu0 0.0
        %1107 = vmatprep.subr.mxu0 0.0
        %1108 = vmatpush1.xpose.msra.mxu0 0.0
        %1109 = vmatprep.subr.mxu0 0.0
        %1110 = vmatpush1.xpose.msra.mxu0 0.0
        %1111 = vmatprep.subr.mxu0 0.0
        %1112 = vmatpush1.xpose.msra.mxu0 0.0
        %1113 = vmatprep.subr.mxu0 0.0
        %1114 = vmatpush1.xpose.msra.mxu0 0.0
        %1115 = vmatprep.subr.mxu0 0.0
        %1116 = vmatpush1.xpose.msra.mxu0 0.0
        %1117 = vmatprep.subr.mxu0 0.0
        %1118 = vmatpush1.xpose.msra.mxu0 0.0
        %1119 = vmatprep.subr.mxu0 0.0
        %1120 = vmatpush1.xpose.msra.mxu0 0.0
        %1121 = vmatprep.subr.mxu0 0.0
        %1122 = vmatpush1.xpose.msra.mxu0 0.0
        %1123 = vmatprep.subr.mxu0 0.0
        %1124 = vmatpush1.xpose.msra.mxu0 0.0
        %1125 = vmatprep.subr.mxu0 0.0
        %1126 = vmatpush1.xpose.msra.mxu0 0.0
        %1127 = vmatprep.subr.mxu0 0.0
        %1128 = vmatpush1.xpose.msra.mxu0 0.0
        %1129 = vmatprep.subr.mxu0 0.0
        %1130 = vmatpush1.xpose.msra.mxu0 0.0
        %1131 = vmatprep.subr.mxu0 0.0
        %1132 = vmatpush1.xpose.msra.mxu0 0.0
        %1133 = vmatprep.subr.mxu0 0.0
        %1134 = vmatpush1.xpose.msra.mxu0 0.0
        %1135 = vmatprep.subr.mxu0 0.0
        %1136 = vmatpush1.xpose.msra.mxu0 0.0
        %1137 = vmatprep.subr.mxu0 0.0
        %1138 = vmatpush1.xpose.msra.mxu0 0.0
        %1139 = vmatprep.subr.mxu0 0.0
        %1140 = vmatpush1.xpose.msra.mxu0 0.0
        %1141 = vmatprep.subr.mxu0 0.0
        %1142 = vmatpush1.xpose.msra.mxu0 0.0
        %1143 = vmatprep.subr.mxu0 0.0
        %1144 = vmatpush1.xpose.msra.mxu0 0.0
        %1145 = vmatprep.mubr.f32.mxu0 0.0
        %1146 = vmatmul.mubr.f32.gmra.mrb[0].mxu0 %v1077
        %v1147 = vpop.f32.mrb[0].mxu0
        %v1148 = vadd.f32 0.0, %v1147
        %v1149 = vpop.f32.mrb[0].mxu0
        %1150 = vdwg.mxu0
        %v1151 = vsel %vm655, %v1148, -inf
        %1152 = vmax.xlane.f32.xlu0 %v1151
        %v1153 = vpop.xlane.xlu0 %1152
        %v1154 = vsub.f32 %v1148, %v1153
        %v1155 = vmul.f32 %v1154, 1.442695
        %v1156 = vpow.pop %v1155
        %v1157 = vsel %vm655, %v1156, 0.0
        %1158 = vadd.xlane.f32.xlu0 %v1157
        %v1159 = vpop.xlane.xlu0 %1158
        %v1160 = vrcp.pop %v1159
        %v1161 = vmul.f32 %v1156, %v1160
        %1162 = vrot.lane.b32.xlu0 %v574, 52
        %v1163 = vpop.permute.xlu0 %1162
        %v1166 = vsel %vm655, %v1161, 0
        %1168 = vmatprep.subr.mxu0 0.0
        %1169 = vmatpush1.msra.mxu0 %v1163
        %1170 = vmatprep.subr.mxu0 0.0
        %1171 = vmatpush1.msra.mxu0 0.0
        %1172 = vmatprep.subr.mxu0 0.0
        %1173 = vmatpush1.msra.mxu0 0.0
        %1174 = vmatprep.subr.mxu0 0.0
        %1175 = vmatpush1.msra.mxu0 0.0
        %1176 = vmatprep.subr.mxu0 0.0
        %1177 = vmatpush1.msra.mxu0 0.0
        %1178 = vmatprep.subr.mxu0 0.0
        %1179 = vmatpush1.msra.mxu0 0.0
        %1180 = vmatprep.subr.mxu0 0.0
        %1181 = vmatpush1.msra.mxu0 0.0
        %1182 = vmatprep.subr.mxu0 0.0
        %1183 = vmatpush1.msra.mxu0 0.0
        %1184 = vmatprep.subr.mxu0 0.0
        %1185 = vmatpush1.msra.mxu0 0.0
        %1186 = vmatprep.subr.mxu0 0.0
        %1187 = vmatpush1.msra.mxu0 0.0
        %1188 = vmatprep.subr.mxu0 0.0
        %1189 = vmatpush1.msra.mxu0 0.0
        %1190 = vmatprep.subr.mxu0 0.0
        %1191 = vmatpush1.msra.mxu0 0.0
        %1192 = vmatprep.subr.mxu0 0.0
        %1193 = vmatpush1.msra.mxu0 0.0
        %1194 = vmatprep.subr.mxu0 0.0
        %1195 = vmatpush1.msra.mxu0 0.0
        %1196 = vmatprep.subr.mxu0 0.0
        %1197 = vmatpush1.msra.mxu0 0.0
        %1198 = vmatprep.subr.mxu0 0.0
        %1199 = vmatpush1.msra.mxu0 0.0
        %1200 = vmatprep.subr.mxu0 0.0
        %1201 = vmatpush1.msra.mxu0 0.0
        %1202 = vmatprep.subr.mxu0 0.0
        %1203 = vmatpush1.msra.mxu0 0.0
        %1204 = vmatprep.subr.mxu0 0.0
        %1205 = vmatpush1.msra.mxu0 0.0
        %1206 = vmatprep.subr.mxu0 0.0
        %1207 = vmatpush1.msra.mxu0 0.0
        %1208 = vmatprep.subr.mxu0 0.0
        %1209 = vmatpush1.msra.mxu0 0.0
        %1210 = vmatprep.subr.mxu0 0.0
        %1211 = vmatpush1.msra.mxu0 0.0
        %1212 = vmatprep.subr.mxu0 0.0
        %1213 = vmatpush1.msra.mxu0 0.0
        %1214 = vmatprep.subr.mxu0 0.0
        %1215 = vmatpush1.msra.mxu0 0.0
        %1216 = vmatprep.subr.mxu0 0.0
        %1217 = vmatpush1.msra.mxu0 0.0
        %1218 = vmatprep.subr.mxu0 0.0
        %1219 = vmatpush1.msra.mxu0 0.0
        %1220 = vmatprep.subr.mxu0 0.0
        %1221 = vmatpush1.msra.mxu0 0.0
        %1222 = vmatprep.subr.mxu0 0.0
        %1223 = vmatpush1.msra.mxu0 0.0
        %1224 = vmatprep.subr.mxu0 0.0
        %1225 = vmatpush1.msra.mxu0 0.0
        %1226 = vmatprep.subr.mxu0 0.0
        %1227 = vmatpush1.msra.mxu0 0.0
        %1228 = vmatprep.subr.mxu0 0.0
        %1229 = vmatpush1.msra.mxu0 0.0
        %1230 = vmatprep.subr.mxu0 0.0
        %1231 = vmatpush1.msra.mxu0 0.0
        %1232 = vmatprep.mubr.f32.mxu0 0.0
        %1233 = vmatmul.mubr.f32.gmra.mrb[0].mxu0 %v1166
        %v1234 = vpop.f32.mrb[0].mxu0
        %v1235 = vadd.f32 0.0, %v1234
        %v1236 = vpop.f32.mrb[0].mxu0
        %1237 = vdwg.mxu0
        %1238 = vrot.lane.b32.xlu0 %v574, 112
        %v1239 = vpop.permute.xlu0 %1238
        %1240 = vrot.lane.b32.xlu0 %v574, 80
        %v1241 = vpop.permute.xlu0 %1240
        %v1242 = vsel %vm580, %v1239, 0
        %v1244 = vsel %vm580, %v1241, 0
        %1246 = vmatprep.subr.mxu0 0.0
        %1247 = vmatpush1.xpose.msra.mxu0 %v1244
        %1248 = vmatprep.subr.mxu0 0.0
        %1249 = vmatpush1.xpose.msra.mxu0 0.0
        %1250 = vmatprep.subr.mxu0 0.0
        %1251 = vmatpush1.xpose.msra.mxu0 0.0
        %1252 = vmatprep.subr.mxu0 0.0
        %1253 = vmatpush1.xpose.msra.mxu0 0.0
        %1254 = vmatprep.subr.mxu0 0.0
        %1255 = vmatpush1.xpose.msra.mxu0 0.0
        %1256 = vmatprep.subr.mxu0 0.0
        %1257 = vmatpush1.xpose.msra.mxu0 0.0
        %1258 = vmatprep.subr.mxu0 0.0
        %1259 = vmatpush1.xpose.msra.mxu0 0.0
        %1260 = vmatprep.subr.mxu0 0.0
        %1261 = vmatpush1.xpose.msra.mxu0 0.0
        %1262 = vmatprep.subr.mxu0 0.0
        %1263 = vmatpush1.xpose.msra.mxu0 0.0
        %1264 = vmatprep.subr.mxu0 0.0
        %1265 = vmatpush1.xpose.msra.mxu0 0.0
        %1266 = vmatprep.subr.mxu0 0.0
        %1267 = vmatpush1.xpose.msra.mxu0 0.0
        %1268 = vmatprep.subr.mxu0 0.0
        %1269 = vmatpush1.xpose.msra.mxu0 0.0
        %1270 = vmatprep.subr.mxu0 0.0
        %1271 = vmatpush1.xpose.msra.mxu0 0.0
        %1272 = vmatprep.subr.mxu0 0.0
        %1273 = vmatpush1.xpose.msra.mxu0 0.0
        %1274 = vmatprep.subr.mxu0 0.0
        %1275 = vmatpush1.xpose.msra.mxu0 0.0
        %1276 = vmatprep.subr.mxu0 0.0
        %1277 = vmatpush1.xpose.msra.mxu0 0.0
        %1278 = vmatprep.subr.mxu0 0.0
        %1279 = vmatpush1.xpose.msra.mxu0 0.0
        %1280 = vmatprep.subr.mxu0 0.0
        %1281 = vmatpush1.xpose.msra.mxu0 0.0
        %1282 = vmatprep.subr.mxu0 0.0
        %1283 = vmatpush1.xpose.msra.mxu0 0.0
        %1284 = vmatprep.subr.mxu0 0.0
        %1285 = vmatpush1.xpose.msra.mxu0 0.0
        %1286 = vmatprep.subr.mxu0 0.0
        %1287 = vmatpush1.xpose.msra.mxu0 0.0
        %1288 = vmatprep.subr.mxu0 0.0
        %1289 = vmatpush1.xpose.msra.mxu0 0.0
        %1290 = vmatprep.subr.mxu0 0.0
        %1291 = vmatpush1.xpose.msra.mxu0 0.0
        %1292 = vmatprep.subr.mxu0 0.0
        %1293 = vmatpush1.xpose.msra.mxu0 0.0
        %1294 = vmatprep.subr.mxu0 0.0
        %1295 = vmatpush1.xpose.msra.mxu0 0.0
        %1296 = vmatprep.subr.mxu0 0.0
        %1297 = vmatpush1.xpose.msra.mxu0 0.0
        %1298 = vmatprep.subr.mxu0 0.0
        %1299 = vmatpush1.xpose.msra.mxu0 0.0
        %1300 = vmatprep.subr.mxu0 0.0
        %1301 = vmatpush1.xpose.msra.mxu0 0.0
        %1302 = vmatprep.subr.mxu0 0.0
        %1303 = vmatpush1.xpose.msra.mxu0 0.0
        %1304 = vmatprep.subr.mxu0 0.0
        %1305 = vmatpush1.xpose.msra.mxu0 0.0
        %1306 = vmatprep.subr.mxu0 0.0
        %1307 = vmatpush1.xpose.msra.mxu0 0.0
        %1308 = vmatprep.subr.mxu0 0.0
        %1309 = vmatpush1.xpose.msra.mxu0 0.0
        %1310 = vmatprep.mubr.f32.mxu0 0.0
        %1311 = vmatmul.mubr.f32.gmra.mrb[0].mxu0 %v1242
        %v1312 = vpop.f32.mrb[0].mxu0
        %v1313 = vadd.f32 0.0, %v1312
        %v1314 = vpop.f32.mrb[0].mxu0
        %1315 = vdwg.mxu0
        %v1316 = vsel %vm655, %v1313, -inf
        %1317 = vmax.xlane.f32.xlu0 %v1316
        %v1318 = vpop.xlane.xlu0 %1317
        %v1319 = vsub.f32 %v1313, %v1318
        %v1320 = vmul.f32 %v1319, 1.442695
        %v1321 = vpow.pop %v1320
        %v1322 = vsel %vm655, %v1321, 0.0
        %1323 = vadd.xlane.f32.xlu0 %v1322
        %v1324 = vpop.xlane.xlu0 %1323
        %v1325 = vrcp.pop %v1324
        %v1326 = vmul.f32 %v1321, %v1325
        %1327 = vrot.lane.b32.xlu0 %v574, 48
        %v1328 = vpop.permute.xlu0 %1327
        %v1331 = vsel %vm655, %v1326, 0
        %1333 = vmatprep.subr.mxu0 0.0
        %1334 = vmatpush1.msra.mxu0 %v1328
        %1335 = vmatprep.subr.mxu0 0.0
        %1336 = vmatpush1.msra.mxu0 0.0
        %1337 = vmatprep.subr.mxu0 0.0
        %1338 = vmatpush1.msra.mxu0 0.0
        %1339 = vmatprep.subr.mxu0 0.0
        %1340 = vmatpush1.msra.mxu0 0.0
        %1341 = vmatprep.subr.mxu0 0.0
        %1342 = vmatpush1.msra.mxu0 0.0
        %1343 = vmatprep.subr.mxu0 0.0
        %1344 = vmatpush1.msra.mxu0 0.0
        %1345 = vmatprep.subr.mxu0 0.0
        %1346 = vmatpush1.msra.mxu0 0.0
        %1347 = vmatprep.subr.mxu0 0.0
        %1348 = vmatpush1.msra.mxu0 0.0
        %1349 = vmatprep.subr.mxu0 0.0
        %1350 = vmatpush1.msra.mxu0 0.0
        %1351 = vmatprep.subr.mxu0 0.0
        %1352 = vmatpush1.msra.mxu0 0.0
        %1353 = vmatprep.subr.mxu0 0.0
        %1354 = vmatpush1.msra.mxu0 0.0
        %1355 = vmatprep.subr.mxu0 0.0
        %1356 = vmatpush1.msra.mxu0 0.0
        %1357 = vmatprep.subr.mxu0 0.0
        %1358 = vmatpush1.msra.mxu0 0.0
        %1359 = vmatprep.subr.mxu0 0.0
        %1360 = vmatpush1.msra.mxu0 0.0
        %1361 = vmatprep.subr.mxu0 0.0
        %1362 = vmatpush1.msra.mxu0 0.0
        %1363 = vmatprep.subr.mxu0 0.0
        %1364 = vmatpush1.msra.mxu0 0.0
        %1365 = vmatprep.subr.mxu0 0.0
        %1366 = vmatpush1.msra.mxu0 0.0
        %1367 = vmatprep.subr.mxu0 0.0
        %1368 = vmatpush1.msra.mxu0 0.0
        %1369 = vmatprep.subr.mxu0 0.0
        %1370 = vmatpush1.msra.mxu0 0.0
        %1371 = vmatprep.subr.mxu0 0.0
        %1372 = vmatpush1.msra.mxu0 0.0
        %1373 = vmatprep.subr.mxu0 0.0
        %1374 = vmatpush1.msra.mxu0 0.0
        %1375 = vmatprep.subr.mxu0 0.0
        %1376 = vmatpush1.msra.mxu0 0.0
        %1377 = vmatprep.subr.mxu0 0.0
        %1378 = vmatpush1.msra.mxu0 0.0
        %1379 = vmatprep.subr.mxu0 0.0
        %1380 = vmatpush1.msra.mxu0 0.0
        %1381 = vmatprep.subr.mxu0 0.0
        %1382 = vmatpush1.msra.mxu0 0.0
        %1383 = vmatprep.subr.mxu0 0.0
        %1384 = vmatpush1.msra.mxu0 0.0
        %1385 = vmatprep.subr.mxu0 0.0
        %1386 = vmatpush1.msra.mxu0 0.0
        %1387 = vmatprep.subr.mxu0 0.0
        %1388 = vmatpush1.msra.mxu0 0.0
        %1389 = vmatprep.subr.mxu0 0.0
        %1390 = vmatpush1.msra.mxu0 0.0
        %1391 = vmatprep.subr.mxu0 0.0
        %1392 = vmatpush1.msra.mxu0 0.0
        %1393 = vmatprep.subr.mxu0 0.0
        %1394 = vmatpush1.msra.mxu0 0.0
        %1395 = vmatprep.subr.mxu0 0.0
        %1396 = vmatpush1.msra.mxu0 0.0
        %1397 = vmatprep.mubr.f32.mxu0 0.0
        %1398 = vmatmul.mubr.f32.gmra.mrb[0].mxu0 %v1331
        %v1399 = vpop.f32.mrb[0].mxu0
        %v1400 = vadd.f32 0.0, %v1399
        %v1401 = vpop.f32.mrb[0].mxu0
        %1402 = vdwg.mxu0
        %1403 = vrot.lane.b32.xlu0 %v574, 108
        %v1404 = vpop.permute.xlu0 %1403
        %1405 = vrot.lane.b32.xlu0 %v574, 76
        %v1406 = vpop.permute.xlu0 %1405
        %v1407 = vsel %vm580, %v1404, 0
        %v1409 = vsel %vm580, %v1406, 0
        %1411 = vmatprep.subr.mxu0 0.0
        %1412 = vmatpush1.xpose.msra.mxu0 %v1409
        %1413 = vmatprep.subr.mxu0 0.0
        %1414 = vmatpush1.xpose.msra.mxu0 0.0
        %1415 = vmatprep.subr.mxu0 0.0
        %1416 = vmatpush1.xpose.msra.mxu0 0.0
        %1417 = vmatprep.subr.mxu0 0.0
        %1418 = vmatpush1.xpose.msra.mxu0 0.0
        %1419 = vmatprep.subr.mxu0 0.0
        %1420 = vmatpush1.xpose.msra.mxu0 0.0
        %1421 = vmatprep.subr.mxu0 0.0
        %1422 = vmatpush1.xpose.msra.mxu0 0.0
        %1423 = vmatprep.subr.mxu0 0.0
        %1424 = vmatpush1.xpose.msra.mxu0 0.0
        %1425 = vmatprep.subr.mxu0 0.0
        %1426 = vmatpush1.xpose.msra.mxu0 0.0
        %1427 = vmatprep.subr.mxu0 0.0
        %1428 = vmatpush1.xpose.msra.mxu0 0.0
        %1429 = vmatprep.subr.mxu0 0.0
        %1430 = vmatpush1.xpose.msra.mxu0 0.0
        %1431 = vmatprep.subr.mxu0 0.0
        %1432 = vmatpush1.xpose.msra.mxu0 0.0
        %1433 = vmatprep.subr.mxu0 0.0
        %1434 = vmatpush1.xpose.msra.mxu0 0.0
        %1435 = vmatprep.subr.mxu0 0.0
        %1436 = vmatpush1.xpose.msra.mxu0 0.0
        %1437 = vmatprep.subr.mxu0 0.0
        %1438 = vmatpush1.xpose.msra.mxu0 0.0
        %1439 = vmatprep.subr.mxu0 0.0
        %1440 = vmatpush1.xpose.msra.mxu0 0.0
        %1441 = vmatprep.subr.mxu0 0.0
        %1442 = vmatpush1.xpose.msra.mxu0 0.0
        %1443 = vmatprep.subr.mxu0 0.0
        %1444 = vmatpush1.xpose.msra.mxu0 0.0
        %1445 = vmatprep.subr.mxu0 0.0
        %1446 = vmatpush1.xpose.msra.mxu0 0.0
        %1447 = vmatprep.subr.mxu0 0.0
        %1448 = vmatpush1.xpose.msra.mxu0 0.0
        %1449 = vmatprep.subr.mxu0 0.0
        %1450 = vmatpush1.xpose.msra.mxu0 0.0
        %1451 = vmatprep.subr.mxu0 0.0
        %1452 = vmatpush1.xpose.msra.mxu0 0.0
        %1453 = vmatprep.subr.mxu0 0.0
        %1454 = vmatpush1.xpose.msra.mxu0 0.0
        %1455 = vmatprep.subr.mxu0 0.0
        %1456 = vmatpush1.xpose.msra.mxu0 0.0
        %1457 = vmatprep.subr.mxu0 0.0
        %1458 = vmatpush1.xpose.msra.mxu0 0.0
        %1459 = vmatprep.subr.mxu0 0.0
        %1460 = vmatpush1.xpose.msra.mxu0 0.0
        %1461 = vmatprep.subr.mxu0 0.0
        %1462 = vmatpush1.xpose.msra.mxu0 0.0
        %1463 = vmatprep.subr.mxu0 0.0
        %1464 = vmatpush1.xpose.msra.mxu0 0.0
        %1465 = vmatprep.subr.mxu0 0.0
        %1466 = vmatpush1.xpose.msra.mxu0 0.0
        %1467 = vmatprep.subr.mxu0 0.0
        %1468 = vmatpush1.xpose.msra.mxu0 0.0
        %1469 = vmatprep.subr.mxu0 0.0
        %1470 = vmatpush1.xpose.msra.mxu0 0.0
        %1471 = vmatprep.subr.mxu0 0.0
        %1472 = vmatpush1.xpose.msra.mxu0 0.0
        %1473 = vmatprep.subr.mxu0 0.0
        %1474 = vmatpush1.xpose.msra.mxu0 0.0
        %1475 = vmatprep.mubr.f32.mxu0 0.0
        %1476 = vmatmul.mubr.f32.gmra.mrb[0].mxu0 %v1407
        %v1477 = vpop.f32.mrb[0].mxu0
        %v1478 = vadd.f32 0.0, %v1477
        %v1479 = vpop.f32.mrb[0].mxu0
        %1480 = vdwg.mxu0
        %v1481 = vsel %vm655, %v1478, -inf
        %1482 = vmax.xlane.f32.xlu0 %v1481
        %v1483 = vpop.xlane.xlu0 %1482
        %v1484 = vsub.f32 %v1478, %v1483
        %v1485 = vmul.f32 %v1484, 1.442695
        %v1486 = vpow.pop %v1485
        %v1487 = vsel %vm655, %v1486, 0.0
        %1488 = vadd.xlane.f32.xlu0 %v1487
        %v1489 = vpop.xlane.xlu0 %1488
        %v1490 = vrcp.pop %v1489
        %v1491 = vmul.f32 %v1486, %v1490
        %1492 = vrot.lane.b32.xlu0 %v574, 44
        %v1493 = vpop.permute.xlu0 %1492
        %v1496 = vsel %vm655, %v1491, 0
        %1498 = vmatprep.subr.mxu0 0.0
        %1499 = vmatpush1.msra.mxu0 %v1493
        %1500 = vmatprep.subr.mxu0 0.0
        %1501 = vmatpush1.msra.mxu0 0.0
        %1502 = vmatprep.subr.mxu0 0.0
        %1503 = vmatpush1.msra.mxu0 0.0
        %1504 = vmatprep.subr.mxu0 0.0
        %1505 = vmatpush1.msra.mxu0 0.0
        %1506 = vmatprep.subr.mxu0 0.0
        %1507 = vmatpush1.msra.mxu0 0.0
        %1508 = vmatprep.subr.mxu0 0.0
        %1509 = vmatpush1.msra.mxu0 0.0
        %1510 = vmatprep.subr.mxu0 0.0
        %1511 = vmatpush1.msra.mxu0 0.0
        %1512 = vmatprep.subr.mxu0 0.0
        %1513 = vmatpush1.msra.mxu0 0.0
        %1514 = vmatprep.subr.mxu0 0.0
        %1515 = vmatpush1.msra.mxu0 0.0
        %1516 = vmatprep.subr.mxu0 0.0
        %1517 = vmatpush1.msra.mxu0 0.0
        %1518 = vmatprep.subr.mxu0 0.0
        %1519 = vmatpush1.msra.mxu0 0.0
        %1520 = vmatprep.subr.mxu0 0.0
        %1521 = vmatpush1.msra.mxu0 0.0
        %1522 = vmatprep.subr.mxu0 0.0
        %1523 = vmatpush1.msra.mxu0 0.0
        %1524 = vmatprep.subr.mxu0 0.0
        %1525 = vmatpush1.msra.mxu0 0.0
        %1526 = vmatprep.subr.mxu0 0.0
        %1527 = vmatpush1.msra.mxu0 0.0
        %1528 = vmatprep.subr.mxu0 0.0
        %1529 = vmatpush1.msra.mxu0 0.0
        %1530 = vmatprep.subr.mxu0 0.0
        %1531 = vmatpush1.msra.mxu0 0.0
        %1532 = vmatprep.subr.mxu0 0.0
        %1533 = vmatpush1.msra.mxu0 0.0
        %1534 = vmatprep.subr.mxu0 0.0
        %1535 = vmatpush1.msra.mxu0 0.0
        %1536 = vmatprep.subr.mxu0 0.0
        %1537 = vmatpush1.msra.mxu0 0.0
        %1538 = vmatprep.subr.mxu0 0.0
        %1539 = vmatpush1.msra.mxu0 0.0
        %1540 = vmatprep.subr.mxu0 0.0
        %1541 = vmatpush1.msra.mxu0 0.0
        %1542 = vmatprep.subr.mxu0 0.0
        %1543 = vmatpush1.msra.mxu0 0.0
        %1544 = vmatprep.subr.mxu0 0.0
        %1545 = vmatpush1.msra.mxu0 0.0
        %1546 = vmatprep.subr.mxu0 0.0
        %1547 = vmatpush1.msra.mxu0 0.0
        %1548 = vmatprep.subr.mxu0 0.0
        %1549 = vmatpush1.msra.mxu0 0.0
        %1550 = vmatprep.subr.mxu0 0.0
        %1551 = vmatpush1.msra.mxu0 0.0
        %1552 = vmatprep.subr.mxu0 0.0
        %1553 = vmatpush1.msra.mxu0 0.0
        %1554 = vmatprep.subr.mxu0 0.0
        %1555 = vmatpush1.msra.mxu0 0.0
        %1556 = vmatprep.subr.mxu0 0.0
        %1557 = vmatpush1.msra.mxu0 0.0
        %1558 = vmatprep.subr.mxu0 0.0
        %1559 = vmatpush1.msra.mxu0 0.0
        %1560 = vmatprep.subr.mxu0 0.0
        %1561 = vmatpush1.msra.mxu0 0.0
        %1562 = vmatprep.mubr.f32.mxu0 0.0
        %1563 = vmatmul.mubr.f32.gmra.mrb[0].mxu0 %v1496
        %v1564 = vpop.f32.mrb[0].mxu0
        %v1565 = vadd.f32 0.0, %v1564
        %v1566 = vpop.f32.mrb[0].mxu0
        %1567 = vdwg.mxu0
        %1568 = vrot.lane.b32.xlu0 %v574, 104
        %v1569 = vpop.permute.xlu0 %1568
        %1570 = vrot.lane.b32.xlu0 %v574, 72
        %v1571 = vpop.permute.xlu0 %1570
        %v1572 = vsel %vm580, %v1569, 0
        %v1574 = vsel %vm580, %v1571, 0
        %1576 = vmatprep.subr.mxu0 0.0
        %1577 = vmatpush1.xpose.msra.mxu0 %v1574
        %1578 = vmatprep.subr.mxu0 0.0
        %1579 = vmatpush1.xpose.msra.mxu0 0.0
        %1580 = vmatprep.subr.mxu0 0.0
        %1581 = vmatpush1.xpose.msra.mxu0 0.0
        %1582 = vmatprep.subr.mxu0 0.0
        %1583 = vmatpush1.xpose.msra.mxu0 0.0
        %1584 = vmatprep.subr.mxu0 0.0
        %1585 = vmatpush1.xpose.msra.mxu0 0.0
        %1586 = vmatprep.subr.mxu0 0.0
        %1587 = vmatpush1.xpose.msra.mxu0 0.0
        %1588 = vmatprep.subr.mxu0 0.0
        %1589 = vmatpush1.xpose.msra.mxu0 0.0
        %1590 = vmatprep.subr.mxu0 0.0
        %1591 = vmatpush1.xpose.msra.mxu0 0.0
        %1592 = vmatprep.subr.mxu0 0.0
        %1593 = vmatpush1.xpose.msra.mxu0 0.0
        %1594 = vmatprep.subr.mxu0 0.0
        %1595 = vmatpush1.xpose.msra.mxu0 0.0
        %1596 = vmatprep.subr.mxu0 0.0
        %1597 = vmatpush1.xpose.msra.mxu0 0.0
        %1598 = vmatprep.subr.mxu0 0.0
        %1599 = vmatpush1.xpose.msra.mxu0 0.0
        %1600 = vmatprep.subr.mxu0 0.0
        %1601 = vmatpush1.xpose.msra.mxu0 0.0
        %1602 = vmatprep.subr.mxu0 0.0
        %1603 = vmatpush1.xpose.msra.mxu0 0.0
        %1604 = vmatprep.subr.mxu0 0.0
        %1605 = vmatpush1.xpose.msra.mxu0 0.0
        %1606 = vmatprep.subr.mxu0 0.0
        %1607 = vmatpush1.xpose.msra.mxu0 0.0
        %1608 = vmatprep.subr.mxu0 0.0
        %1609 = vmatpush1.xpose.msra.mxu0 0.0
        %1610 = vmatprep.subr.mxu0 0.0
        %1611 = vmatpush1.xpose.msra.mxu0 0.0
        %1612 = vmatprep.subr.mxu0 0.0
        %1613 = vmatpush1.xpose.msra.mxu0 0.0
        %1614 = vmatprep.subr.mxu0 0.0
        %1615 = vmatpush1.xpose.msra.mxu0 0.0
        %1616 = vmatprep.subr.mxu0 0.0
        %1617 = vmatpush1.xpose.msra.mxu0 0.0
        %1618 = vmatprep.subr.mxu0 0.0
        %1619 = vmatpush1.xpose.msra.mxu0 0.0
        %1620 = vmatprep.subr.mxu0 0.0
        %1621 = vmatpush1.xpose.msra.mxu0 0.0
        %1622 = vmatprep.subr.mxu0 0.0
        %1623 = vmatpush1.xpose.msra.mxu0 0.0
        %1624 = vmatprep.subr.mxu0 0.0
        %1625 = vmatpush1.xpose.msra.mxu0 0.0
        %1626 = vmatprep.subr.mxu0 0.0
        %1627 = vmatpush1.xpose.msra.mxu0 0.0
        %1628 = vmatprep.subr.mxu0 0.0
        %1629 = vmatpush1.xpose.msra.mxu0 0.0
        %1630 = vmatprep.subr.mxu0 0.0
        %1631 = vmatpush1.xpose.msra.mxu0 0.0
        %1632 = vmatprep.subr.mxu0 0.0
        %1633 = vmatpush1.xpose.msra.mxu0 0.0
        %1634 = vmatprep.subr.mxu0 0.0
        %1635 = vmatpush1.xpose.msra.mxu0 0.0
        %1636 = vmatprep.subr.mxu0 0.0
        %1637 = vmatpush1.xpose.msra.mxu0 0.0
        %1638 = vmatprep.subr.mxu0 0.0
        %1639 = vmatpush1.xpose.msra.mxu0 0.0
        %1640 = vmatprep.mubr.f32.mxu0 0.0
        %1641 = vmatmul.mubr.f32.gmra.mrb[0].mxu0 %v1572
        %v1642 = vpop.f32.mrb[0].mxu0
        %v1643 = vadd.f32 0.0, %v1642
        %v1644 = vpop.f32.mrb[0].mxu0
        %1645 = vdwg.mxu0
        %v1646 = vsel %vm655, %v1643, -inf
        %1647 = vmax.xlane.f32.xlu0 %v1646
        %v1648 = vpop.xlane.xlu0 %1647
        %v1649 = vsub.f32 %v1643, %v1648
        %v1650 = vmul.f32 %v1649, 1.442695
        %v1651 = vpow.pop %v1650
        %v1652 = vsel %vm655, %v1651, 0.0
        %1653 = vadd.xlane.f32.xlu0 %v1652
        %v1654 = vpop.xlane.xlu0 %1653
        %v1655 = vrcp.pop %v1654
        %v1656 = vmul.f32 %v1651, %v1655
        %1657 = vrot.lane.b32.xlu0 %v574, 40
        %v1658 = vpop.permute.xlu0 %1657
        %v1661 = vsel %vm655, %v1656, 0
        %1663 = vmatprep.subr.mxu0 0.0
        %1664 = vmatpush1.msra.mxu0 %v1658
        %1665 = vmatprep.subr.mxu0 0.0
        %1666 = vmatpush1.msra.mxu0 0.0
        %1667 = vmatprep.subr.mxu0 0.0
        %1668 = vmatpush1.msra.mxu0 0.0
        %1669 = vmatprep.subr.mxu0 0.0
        %1670 = vmatpush1.msra.mxu0 0.0
        %1671 = vmatprep.subr.mxu0 0.0
        %1672 = vmatpush1.msra.mxu0 0.0
        %1673 = vmatprep.subr.mxu0 0.0
        %1674 = vmatpush1.msra.mxu0 0.0
        %1675 = vmatprep.subr.mxu0 0.0
        %1676 = vmatpush1.msra.mxu0 0.0
        %1677 = vmatprep.subr.mxu0 0.0
        %1678 = vmatpush1.msra.mxu0 0.0
        %1679 = vmatprep.subr.mxu0 0.0
        %1680 = vmatpush1.msra.mxu0 0.0
        %1681 = vmatprep.subr.mxu0 0.0
        %1682 = vmatpush1.msra.mxu0 0.0
        %1683 = vmatprep.subr.mxu0 0.0
        %1684 = vmatpush1.msra.mxu0 0.0
        %1685 = vmatprep.subr.mxu0 0.0
        %1686 = vmatpush1.msra.mxu0 0.0
        %1687 = vmatprep.subr.mxu0 0.0
        %1688 = vmatpush1.msra.mxu0 0.0
        %1689 = vmatprep.subr.mxu0 0.0
        %1690 = vmatpush1.msra.mxu0 0.0
        %1691 = vmatprep.subr.mxu0 0.0
        %1692 = vmatpush1.msra.mxu0 0.0
        %1693 = vmatprep.subr.mxu0 0.0
        %1694 = vmatpush1.msra.mxu0 0.0
        %1695 = vmatprep.subr.mxu0 0.0
        %1696 = vmatpush1.msra.mxu0 0.0
        %1697 = vmatprep.subr.mxu0 0.0
        %1698 = vmatpush1.msra.mxu0 0.0
        %1699 = vmatprep.subr.mxu0 0.0
        %1700 = vmatpush1.msra.mxu0 0.0
        %1701 = vmatprep.subr.mxu0 0.0
        %1702 = vmatpush1.msra.mxu0 0.0
        %1703 = vmatprep.subr.mxu0 0.0
        %1704 = vmatpush1.msra.mxu0 0.0
        %1705 = vmatprep.subr.mxu0 0.0
        %1706 = vmatpush1.msra.mxu0 0.0
        %1707 = vmatprep.subr.mxu0 0.0
        %1708 = vmatpush1.msra.mxu0 0.0
        %1709 = vmatprep.subr.mxu0 0.0
        %1710 = vmatpush1.msra.mxu0 0.0
        %1711 = vmatprep.subr.mxu0 0.0
        %1712 = vmatpush1.msra.mxu0 0.0
        %1713 = vmatprep.subr.mxu0 0.0
        %1714 = vmatpush1.msra.mxu0 0.0
        %1715 = vmatprep.subr.mxu0 0.0
        %1716 = vmatpush1.msra.mxu0 0.0
        %1717 = vmatprep.subr.mxu0 0.0
        %1718 = vmatpush1.msra.mxu0 0.0
        %1719 = vmatprep.subr.mxu0 0.0
        %1720 = vmatpush1.msra.mxu0 0.0
        %1721 = vmatprep.subr.mxu0 0.0
        %1722 = vmatpush1.msra.mxu0 0.0
        %1723 = vmatprep.subr.mxu0 0.0
        %1724 = vmatpush1.msra.mxu0 0.0
        %1725 = vmatprep.subr.mxu0 0.0
        %1726 = vmatpush1.msra.mxu0 0.0
        %1727 = vmatprep.mubr.f32.mxu0 0.0
        %1728 = vmatmul.mubr.f32.gmra.mrb[0].mxu0 %v1661
        %v1729 = vpop.f32.mrb[0].mxu0
        %v1730 = vadd.f32 0.0, %v1729
        %v1731 = vpop.f32.mrb[0].mxu0
        %1732 = vdwg.mxu0
        %1733 = vrot.lane.b32.xlu0 %v574, 100
        %v1734 = vpop.permute.xlu0 %1733
        %1735 = vrot.lane.b32.xlu0 %v574, 68
        %v1736 = vpop.permute.xlu0 %1735
        %v1737 = vsel %vm580, %v1734, 0
        %v1739 = vsel %vm580, %v1736, 0
        %1741 = vmatprep.subr.mxu0 0.0
        %1742 = vmatpush1.xpose.msra.mxu0 %v1739
        %1743 = vmatprep.subr.mxu0 0.0
        %1744 = vmatpush1.xpose.msra.mxu0 0.0
        %1745 = vmatprep.subr.mxu0 0.0
        %1746 = vmatpush1.xpose.msra.mxu0 0.0
        %1747 = vmatprep.subr.mxu0 0.0
        %1748 = vmatpush1.xpose.msra.mxu0 0.0
        %1749 = vmatprep.subr.mxu0 0.0
        %1750 = vmatpush1.xpose.msra.mxu0 0.0
        %1751 = vmatprep.subr.mxu0 0.0
        %1752 = vmatpush1.xpose.msra.mxu0 0.0
        %1753 = vmatprep.subr.mxu0 0.0
        %1754 = vmatpush1.xpose.msra.mxu0 0.0
        %1755 = vmatprep.subr.mxu0 0.0
        %1756 = vmatpush1.xpose.msra.mxu0 0.0
        %1757 = vmatprep.subr.mxu0 0.0
        %1758 = vmatpush1.xpose.msra.mxu0 0.0
        %1759 = vmatprep.subr.mxu0 0.0
        %1760 = vmatpush1.xpose.msra.mxu0 0.0
        %1761 = vmatprep.subr.mxu0 0.0
        %1762 = vmatpush1.xpose.msra.mxu0 0.0
        %1763 = vmatprep.subr.mxu0 0.0
        %1764 = vmatpush1.xpose.msra.mxu0 0.0
        %1765 = vmatprep.subr.mxu0 0.0
        %1766 = vmatpush1.xpose.msra.mxu0 0.0
        %1767 = vmatprep.subr.mxu0 0.0
        %1768 = vmatpush1.xpose.msra.mxu0 0.0
        %1769 = vmatprep.subr.mxu0 0.0
        %1770 = vmatpush1.xpose.msra.mxu0 0.0
        %1771 = vmatprep.subr.mxu0 0.0
        %1772 = vmatpush1.xpose.msra.mxu0 0.0
        %1773 = vmatprep.subr.mxu0 0.0
        %1774 = vmatpush1.xpose.msra.mxu0 0.0
        %1775 = vmatprep.subr.mxu0 0.0
        %1776 = vmatpush1.xpose.msra.mxu0 0.0
        %1777 = vmatprep.subr.mxu0 0.0
        %1778 = vmatpush1.xpose.msra.mxu0 0.0
        %1779 = vmatprep.subr.mxu0 0.0
        %1780 = vmatpush1.xpose.msra.mxu0 0.0
        %1781 = vmatprep.subr.mxu0 0.0
        %1782 = vmatpush1.xpose.msra.mxu0 0.0
        %1783 = vmatprep.subr.mxu0 0.0
        %1784 = vmatpush1.xpose.msra.mxu0 0.0
        %1785 = vmatprep.subr.mxu0 0.0
        %1786 = vmatpush1.xpose.msra.mxu0 0.0
        %1787 = vmatprep.subr.mxu0 0.0
        %1788 = vmatpush1.xpose.msra.mxu0 0.0
        %1789 = vmatprep.subr.mxu0 0.0
        %1790 = vmatpush1.xpose.msra.mxu0 0.0
        %1791 = vmatprep.subr.mxu0 0.0
        %1792 = vmatpush1.xpose.msra.mxu0 0.0
        %1793 = vmatprep.subr.mxu0 0.0
        %1794 = vmatpush1.xpose.msra.mxu0 0.0
        %1795 = vmatprep.subr.mxu0 0.0
        %1796 = vmatpush1.xpose.msra.mxu0 0.0
        %1797 = vmatprep.subr.mxu0 0.0
        %1798 = vmatpush1.xpose.msra.mxu0 0.0
        %1799 = vmatprep.subr.mxu0 0.0
        %1800 = vmatpush1.xpose.msra.mxu0 0.0
        %1801 = vmatprep.subr.mxu0 0.0
        %1802 = vmatpush1.xpose.msra.mxu0 0.0
        %1803 = vmatprep.subr.mxu0 0.0
        %1804 = vmatpush1.xpose.msra.mxu0 0.0
        %1805 = vmatprep.mubr.f32.mxu0 0.0
        %1806 = vmatmul.mubr.f32.gmra.mrb[0].mxu0 %v1737
        %v1807 = vpop.f32.mrb[0].mxu0
        %v1808 = vadd.f32 0.0, %v1807
        %v1809 = vpop.f32.mrb[0].mxu0
        %1810 = vdwg.mxu0
        %v1811 = vsel %vm655, %v1808, -inf
        %1812 = vmax.xlane.f32.xlu0 %v1811
        %v1813 = vpop.xlane.xlu0 %1812
        %v1814 = vsub.f32 %v1808, %v1813
        %v1815 = vmul.f32 %v1814, 1.442695
        %v1816 = vpow.pop %v1815
        %v1817 = vsel %vm655, %v1816, 0.0
        %1818 = vadd.xlane.f32.xlu0 %v1817
        %v1819 = vpop.xlane.xlu0 %1818
        %v1820 = vrcp.pop %v1819
        %v1821 = vmul.f32 %v1816, %v1820
        %1822 = vrot.lane.b32.xlu0 %v574, 36
        %v1823 = vpop.permute.xlu0 %1822
        %v1826 = vsel %vm655, %v1821, 0
        %1828 = vmatprep.subr.mxu0 0.0
        %1829 = vmatpush1.msra.mxu0 %v1823
        %1830 = vmatprep.subr.mxu0 0.0
        %1831 = vmatpush1.msra.mxu0 0.0
        %1832 = vmatprep.subr.mxu0 0.0
        %1833 = vmatpush1.msra.mxu0 0.0
        %1834 = vmatprep.subr.mxu0 0.0
        %1835 = vmatpush1.msra.mxu0 0.0
        %1836 = vmatprep.subr.mxu0 0.0
        %1837 = vmatpush1.msra.mxu0 0.0
        %1838 = vmatprep.subr.mxu0 0.0
        %1839 = vmatpush1.msra.mxu0 0.0
        %1840 = vmatprep.subr.mxu0 0.0
        %1841 = vmatpush1.msra.mxu0 0.0
        %1842 = vmatprep.subr.mxu0 0.0
        %1843 = vmatpush1.msra.mxu0 0.0
        %1844 = vmatprep.subr.mxu0 0.0
        %1845 = vmatpush1.msra.mxu0 0.0
        %1846 = vmatprep.subr.mxu0 0.0
        %1847 = vmatpush1.msra.mxu0 0.0
        %1848 = vmatprep.subr.mxu0 0.0
        %1849 = vmatpush1.msra.mxu0 0.0
        %1850 = vmatprep.subr.mxu0 0.0
        %1851 = vmatpush1.msra.mxu0 0.0
        %1852 = vmatprep.subr.mxu0 0.0
        %1853 = vmatpush1.msra.mxu0 0.0
        %1854 = vmatprep.subr.mxu0 0.0
        %1855 = vmatpush1.msra.mxu0 0.0
        %1856 = vmatprep.subr.mxu0 0.0
        %1857 = vmatpush1.msra.mxu0 0.0
        %1858 = vmatprep.subr.mxu0 0.0
        %1859 = vmatpush1.msra.mxu0 0.0
        %1860 = vmatprep.subr.mxu0 0.0
        %1861 = vmatpush1.msra.mxu0 0.0
        %1862 = vmatprep.subr.mxu0 0.0
        %1863 = vmatpush1.msra.mxu0 0.0
        %1864 = vmatprep.subr.mxu0 0.0
        %1865 = vmatpush1.msra.mxu0 0.0
        %1866 = vmatprep.subr.mxu0 0.0
        %1867 = vmatpush1.msra.mxu0 0.0
        %1868 = vmatprep.subr.mxu0 0.0
        %1869 = vmatpush1.msra.mxu0 0.0
        %1870 = vmatprep.subr.mxu0 0.0
        %1871 = vmatpush1.msra.mxu0 0.0
        %1872 = vmatprep.subr.mxu0 0.0
        %1873 = vmatpush1.msra.mxu0 0.0
        %1874 = vmatprep.subr.mxu0 0.0
        %1875 = vmatpush1.msra.mxu0 0.0
        %1876 = vmatprep.subr.mxu0 0.0
        %1877 = vmatpush1.msra.mxu0 0.0
        %1878 = vmatprep.subr.mxu0 0.0
        %1879 = vmatpush1.msra.mxu0 0.0
        %1880 = vmatprep.subr.mxu0 0.0
        %1881 = vmatpush1.msra.mxu0 0.0
        %1882 = vmatprep.subr.mxu0 0.0
        %1883 = vmatpush1.msra.mxu0 0.0
        %1884 = vmatprep.subr.mxu0 0.0
        %1885 = vmatpush1.msra.mxu0 0.0
        %1886 = vmatprep.subr.mxu0 0.0
        %1887 = vmatpush1.msra.mxu0 0.0
        %1888 = vmatprep.subr.mxu0 0.0
        %1889 = vmatpush1.msra.mxu0 0.0
        %1890 = vmatprep.subr.mxu0 0.0
        %1891 = vmatpush1.msra.mxu0 0.0
        %1892 = vmatprep.mubr.f32.mxu0 0.0
        %1893 = vmatmul.mubr.f32.gmra.mrb[0].mxu0 %v1826
        %v1894 = vpop.f32.mrb[0].mxu0
        %v1895 = vadd.f32 0.0, %v1894
        %v1896 = vpop.f32.mrb[0].mxu0
        %1897 = vdwg.mxu0
        %1899 = vrot.lane.b32.xlu0 %v905, 4
        %v1900 = vpop.permute.xlu0 %1899
        %1903 = vrot.lane.b32.xlu0 %v1070, 8
        %v1904 = vpop.permute.xlu0 %1903
        %1907 = vrot.lane.b32.xlu0 %v1235, 12
        %v1908 = vpop.permute.xlu0 %1907
        %1911 = vrot.lane.b32.xlu0 %v1400, 16
        %v1912 = vpop.permute.xlu0 %1911
        %1915 = vrot.lane.b32.xlu0 %v1565, 20
        %v1916 = vpop.permute.xlu0 %1915
        %1919 = vrot.lane.b32.xlu0 %v1730, 24
        %v1920 = vpop.permute.xlu0 %1919
        %1923 = vrot.lane.b32.xlu0 %v1895, 28
        %v1924 = vpop.permute.xlu0 %1923
        %v1926 = vsel %vm580, %v740, %v1900
        %v1927 = vsel %vm655, %v1926, %v1904
        %vm1928 = vcmask 97280
        %v1929 = vsel %vm1928, %v1927, %v1908
        %vm1930 = vcmask 130048
        %v1931 = vsel %vm1930, %v1929, %v1912
        %vm1932 = vcmask 162816
        %v1933 = vsel %vm1932, %v1931, %v1916
        %vm1934 = vcmask 195584
        %v1935 = vsel %vm1934, %v1933, %v1920
        %vm1936 = vcmask 228352
        %v1937 = vsel %vm1936, %v1935, %v1924
        %v1938 = vlaneseq
        %v1939 = vshrl.u32 %v1938, 7
        %v1940 = vsub.s32 1, %v1939
        %v1941 = vrot.slane %v498, %v1940
        %v1943 = vsel %vm503, %v1937, 0
        %1945 = vmatprep.subr.mxu0 0.0
        %1946 = vmatpush1.msra.mxu0 %v482
        %1947 = vmatprep.subr.mxu0 0.0
        %1948 = vmatpush1.msra.mxu0 %v483
        %1949 = vmatprep.subr.mxu0 0.0
        %1950 = vmatpush1.msra.mxu0 %v484
        %1951 = vmatprep.subr.mxu0 0.0
        %1952 = vmatpush1.msra.mxu0 %v485
        %1953 = vmatprep.subr.mxu0 0.0
        %1954 = vmatpush1.msra.mxu0 0.0
        %1955 = vmatprep.subr.mxu0 0.0
        %1956 = vmatpush1.msra.mxu0 0.0
        %1957 = vmatprep.subr.mxu0 0.0
        %1958 = vmatpush1.msra.mxu0 0.0
        %1959 = vmatprep.subr.mxu0 0.0
        %1960 = vmatpush1.msra.mxu0 0.0
        %1961 = vmatprep.subr.mxu0 0.0
        %1962 = vmatpush1.msra.mxu0 0.0
        %1963 = vmatprep.subr.mxu0 0.0
        %1964 = vmatpush1.msra.mxu0 0.0
        %1965 = vmatprep.subr.mxu0 0.0
        %1966 = vmatpush1.msra.mxu0 0.0
        %1967 = vmatprep.subr.mxu0 0.0
        %1968 = vmatpush1.msra.mxu0 0.0
        %1969 = vmatprep.subr.mxu0 0.0
        %1970 = vmatpush1.msra.mxu0 0.0
        %1971 = vmatprep.subr.mxu0 0.0
        %1972 = vmatpush1.msra.mxu0 0.0
        %1973 = vmatprep.subr.mxu0 0.0
        %1974 = vmatpush1.msra.mxu0 0.0
        %1975 = vmatprep.subr.mxu0 0.0
        %1976 = vmatpush1.msra.mxu0 0.0
        %1977 = vmatprep.subr.mxu0 0.0
        %1978 = vmatpush1.msra.mxu0 0.0
        %1979 = vmatprep.subr.mxu0 0.0
        %1980 = vmatpush1.msra.mxu0 0.0
        %1981 = vmatprep.subr.mxu0 0.0
        %1982 = vmatpush1.msra.mxu0 0.0
        %1983 = vmatprep.subr.mxu0 0.0
        %1984 = vmatpush1.msra.mxu0 0.0
        %1985 = vmatprep.subr.mxu0 0.0
        %1986 = vmatpush1.msra.mxu0 0.0
        %1987 = vmatprep.subr.mxu0 0.0
        %1988 = vmatpush1.msra.mxu0 0.0
        %1989 = vmatprep.subr.mxu0 0.0
        %1990 = vmatpush1.msra.mxu0 0.0
        %1991 = vmatprep.subr.mxu0 0.0
        %1992 = vmatpush1.msra.mxu0 0.0
        %1993 = vmatprep.subr.mxu0 0.0
        %1994 = vmatpush1.msra.mxu0 0.0
        %1995 = vmatprep.subr.mxu0 0.0
        %1996 = vmatpush1.msra.mxu0 0.0
        %1997 = vmatprep.subr.mxu0 0.0
        %1998 = vmatpush1.msra.mxu0 0.0
        %1999 = vmatprep.subr.mxu0 0.0
        %2000 = vmatpush1.msra.mxu0 0.0
        %2001 = vmatprep.subr.mxu0 0.0
        %2002 = vmatpush1.msra.mxu0 0.0
        %2003 = vmatprep.subr.mxu0 0.0
        %2004 = vmatpush1.msra.mxu0 0.0
        %2005 = vmatprep.subr.mxu0 0.0
        %2006 = vmatpush1.msra.mxu0 0.0
        %2007 = vmatprep.subr.mxu0 0.0
        %2008 = vmatpush1.msra.mxu0 0.0
        %2009 = vmatprep.mubr.f32.mxu0 0.0
        %2010 = vmatmul.mubr.f32.gmra.mrb[0].mxu0 %v1943
        %v2011 = vpop.f32.mrb[0].mxu0
        %v2012 = vadd.f32 %v1941, %v2011
        %v2013 = vpop.f32.mrb[0].mxu0
        %2014 = vdwg.mxu0
        %v2015 = vadd.f32 %v477, %v2012
        %v2016 = vsel %vm503, %v2015, 0.0
        %2017 = vadd.xlane.f32.xlu0 %v2016
        %v2018 = vpop.xlane.xlu0 %2017
        %v2019 = vrcp.pop 32.0
        %v2020 = vmul.f32 %v2018, %v2019
        %v2021 = vsub.f32 %v2015, %v2020
        %v2022 = vmul.f32 %v2021, %v2021
        %v2023 = vsel %vm503, %v2022, 0.0
        %2024 = vadd.xlane.f32.xlu0 %v2023
        %v2025 = vpop.xlane.xlu0 %2024
        %v2026 = vmul.f32 %v2025, %v2019
        %v2027 = vadd.f32 %v2026, 1e-05
        %v2028 = vrsqrt.pop %v2027
        %v2029 = vmul.f32 %v2021, %v2028
        %v2030 = vlaneseq
        %v2031 = vshrl.u32 %v2030, 7
        %v2032 = vsub.s32 4, %v2031
        %v2033 = vrot.slane %v498, %v2032
        %v2034 = vmul.f32 %v2029, %v2033
        %v2035 = vlaneseq
        %v2036 = vshrl.u32 %v2035, 7
        %v2037 = vsub.s32 5, %v2036
        %v2038 = vrot.slane %v498, %v2037
        %v2039 = vadd.f32 %v2034, %v2038
        %v2040 = vlaneseq
        %v2041 = vshrl.u32 %v2040, 7
        %v2042 = vsub.s32 2, %v2041
        %v2043 = vrot.slane %v498, %v2042
        %v2045 = vsel %vm503, %v2039, 0
        %2047 = vmatprep.subr.mxu0 0.0
        %2048 = vmatpush1.msra.mxu0 %v486
        %2049 = vmatprep.subr.mxu0 0.0
        %2050 = vmatpush1.msra.mxu0 %v487
        %2051 = vmatprep.subr.mxu0 0.0
        %2052 = vmatpush1.msra.mxu0 %v488
        %2053 = vmatprep.subr.mxu0 0.0
        %2054 = vmatpush1.msra.mxu0 %v489
        %2055 = vmatprep.subr.mxu0 0.0
        %2056 = vmatpush1.msra.mxu0 0.0
        %2057 = vmatprep.subr.mxu0 0.0
        %2058 = vmatpush1.msra.mxu0 0.0
        %2059 = vmatprep.subr.mxu0 0.0
        %2060 = vmatpush1.msra.mxu0 0.0
        %2061 = vmatprep.subr.mxu0 0.0
        %2062 = vmatpush1.msra.mxu0 0.0
        %2063 = vmatprep.subr.mxu0 0.0
        %2064 = vmatpush1.msra.mxu0 0.0
        %2065 = vmatprep.subr.mxu0 0.0
        %2066 = vmatpush1.msra.mxu0 0.0
        %2067 = vmatprep.subr.mxu0 0.0
        %2068 = vmatpush1.msra.mxu0 0.0
        %2069 = vmatprep.subr.mxu0 0.0
        %2070 = vmatpush1.msra.mxu0 0.0
        %2071 = vmatprep.subr.mxu0 0.0
        %2072 = vmatpush1.msra.mxu0 0.0
        %2073 = vmatprep.subr.mxu0 0.0
        %2074 = vmatpush1.msra.mxu0 0.0
        %2075 = vmatprep.subr.mxu0 0.0
        %2076 = vmatpush1.msra.mxu0 0.0
        %2077 = vmatprep.subr.mxu0 0.0
        %2078 = vmatpush1.msra.mxu0 0.0
        %2079 = vmatprep.subr.mxu0 0.0
        %2080 = vmatpush1.msra.mxu0 0.0
        %2081 = vmatprep.subr.mxu0 0.0
        %2082 = vmatpush1.msra.mxu0 0.0
        %2083 = vmatprep.subr.mxu0 0.0
        %2084 = vmatpush1.msra.mxu0 0.0
        %2085 = vmatprep.subr.mxu0 0.0
        %2086 = vmatpush1.msra.mxu0 0.0
        %2087 = vmatprep.subr.mxu0 0.0
        %2088 = vmatpush1.msra.mxu0 0.0
        %2089 = vmatprep.subr.mxu0 0.0
        %2090 = vmatpush1.msra.mxu0 0.0
        %2091 = vmatprep.subr.mxu0 0.0
        %2092 = vmatpush1.msra.mxu0 0.0
        %2093 = vmatprep.subr.mxu0 0.0
        %2094 = vmatpush1.msra.mxu0 0.0
        %2095 = vmatprep.subr.mxu0 0.0
        %2096 = vmatpush1.msra.mxu0 0.0
        %2097 = vmatprep.subr.mxu0 0.0
        %2098 = vmatpush1.msra.mxu0 0.0
        %2099 = vmatprep.subr.mxu0 0.0
        %2100 = vmatpush1.msra.mxu0 0.0
        %2101 = vmatprep.subr.mxu0 0.0
        %2102 = vmatpush1.msra.mxu0 0.0
        %2103 = vmatprep.subr.mxu0 0.0
        %2104 = vmatpush1.msra.mxu0 0.0
        %2105 = vmatprep.subr.mxu0 0.0
        %2106 = vmatpush1.msra.mxu0 0.0
        %2107 = vmatprep.subr.mxu0 0.0
        %2108 = vmatpush1.msra.mxu0 0.0
        %2109 = vmatprep.subr.mxu0 0.0
        %2110 = vmatpush1.msra.mxu0 0.0
        %2111 = vmatprep.mubr.f32.mxu0 0.0
        %2112 = vmatmul.mubr.f32.gmra.mrb[0].mxu0 %v2045
        %v2113 = vpop.f32.mrb[0].mxu0
        %v2114 = vadd.f32 %v2043, %v2113
        %v2115 = vpop.f32.mrb[0].mxu0
        %2116 = vdwg.mxu0
        %v2117 = vmax.f32 %v2114, 0.0
        %v2118 = vlaneseq
        %v2119 = vshrl.u32 %v2118, 7
        %v2120 = vsub.s32 3, %v2119
        %v2121 = vrot.slane %v498, %v2120
        %vm2122 = vcmask 523264
        %v2124 = vsel %vm2122, %v2117, 0
        %2126 = vmatprep.subr.mxu0 0.0
        %2127 = vmatpush1.msra.mxu0 %v490
        %2128 = vmatprep.subr.mxu0 0.0
        %2129 = vmatpush1.msra.mxu0 %v491
        %2130 = vmatprep.subr.mxu0 0.0
        %2131 = vmatpush1.msra.mxu0 %v492
        %2132 = vmatprep.subr.mxu0 0.0
        %2133 = vmatpush1.msra.mxu0 %v493
        %2134 = vmatprep.subr.mxu0 0.0
        %2135 = vmatpush1.msra.mxu0 %v494
        %2136 = vmatprep.subr.mxu0 0.0
        %2137 = vmatpush1.msra.mxu0 %v495
        %2138 = vmatprep.subr.mxu0 0.0
        %2139 = vmatpush1.msra.mxu0 %v496
        %2140 = vmatprep.subr.mxu0 0.0
        %2141 = vmatpush1.msra.mxu0 %v497
        %2142 = vmatprep.subr.mxu0 0.0
        %2143 = vmatpush1.msra.mxu0 0.0
        %2144 = vmatprep.subr.mxu0 0.0
        %2145 = vmatpush1.msra.mxu0 0.0
        %2146 = vmatprep.subr.mxu0 0.0
        %2147 = vmatpush1.msra.mxu0 0.0
        %2148 = vmatprep.subr.mxu0 0.0
        %2149 = vmatpush1.msra.mxu0 0.0
        %2150 = vmatprep.subr.mxu0 0.0
        %2151 = vmatpush1.msra.mxu0 0.0
        %2152 = vmatprep.subr.mxu0 0.0
        %2153 = vmatpush1.msra.mxu0 0.0
        %2154 = vmatprep.subr.mxu0 0.0
        %2155 = vmatpush1.msra.mxu0 0.0
        %2156 = vmatprep.subr.mxu0 0.0
        %2157 = vmatpush1.msra.mxu0 0.0
        %2158 = vmatprep.subr.mxu0 0.0
        %2159 = vmatpush1.msra.mxu0 0.0
        %2160 = vmatprep.subr.mxu0 0.0
        %2161 = vmatpush1.msra.mxu0 0.0
        %2162 = vmatprep.subr.mxu0 0.0
        %2163 = vmatpush1.msra.mxu0 0.0
        %2164 = vmatprep.subr.mxu0 0.0
        %2165 = vmatpush1.msra.mxu0 0.0
        %2166 = vmatprep.subr.mxu0 0.0
        %2167 = vmatpush1.msra.mxu0 0.0
        %2168 = vmatprep.subr.mxu0 0.0
        %2169 = vmatpush1.msra.mxu0 0.0
        %2170 = vmatprep.subr.mxu0 0.0
        %2171 = vmatpush1.msra.mxu0 0.0
        %2172 = vmatprep.subr.mxu0 0.0
        %2173 = vmatpush1.msra.mxu0 0.0
        %2174 = vmatprep.subr.mxu0 0.0
        %2175 = vmatpush1.msra.mxu0 0.0
        %2176 = vmatprep.subr.mxu0 0.0
        %2177 = vmatpush1.msra.mxu0 0.0
        %2178 = vmatprep.subr.mxu0 0.0
        %2179 = vmatpush1.msra.mxu0 0.0
        %2180 = vmatprep.subr.mxu0 0.0
        %2181 = vmatpush1.msra.mxu0 0.0
        %2182 = vmatprep.subr.mxu0 0.0
        %2183 = vmatpush1.msra.mxu0 0.0
        %2184 = vmatprep.subr.mxu0 0.0
        %2185 = vmatpush1.msra.mxu0 0.0
        %2186 = vmatprep.subr.mxu0 0.0
        %2187 = vmatpush1.msra.mxu0 0.0
        %2188 = vmatprep.subr.mxu0 0.0
        %2189 = vmatpush1.msra.mxu0 0.0
        %2190 = vmatprep.mubr.f32.mxu0 0.0
        %2191 = vmatmul.mubr.f32.gmra.mrb[0].mxu0 %v2124
        %v2192 = vpop.f32.mrb[0].mxu0
        %v2193 = vadd.f32 %v2121, %v2192
        %v2194 = vpop.f32.mrb[0].mxu0
        %2195 = vdwg.mxu0
        %v2196 = vadd.f32 %v2039, %v2193
        %v2197 = vsel %vm503, %v2196, 0.0
        %2198 = vadd.xlane.f32.xlu0 %v2197
        %v2199 = vpop.xlane.xlu0 %2198
        %v2200 = vmul.f32 %v2199, %v2019
        %v2201 = vsub.f32 %v2196, %v2200
        %v2202 = vmul.f32 %v2201, %v2201
        %v2203 = vsel %vm503, %v2202, 0.0
        %2204 = vadd.xlane.f32.xlu0 %v2203
        %v2205 = vpop.xlane.xlu0 %2204
        %v2206 = vmul.f32 %v2205, %v2019
        %v2207 = vadd.f32 %v2206, 1e-05
        %v2208 = vrsqrt.pop %v2207
        %v2209 = vmul.f32 %v2201, %v2208
        %v2210 = vlaneseq
        %v2211 = vshrl.u32 %v2210, 7
        %v2212 = vsub.s32 6, %v2211
        %v2213 = vrot.slane %v498, %v2212
        %v2214 = vmul.f32 %v2209, %v2213
        %v2215 = vlaneseq
        %v2216 = vshrl.u32 %v2215, 7
        %v2217 = vsub.s32 7, %v2216
        %v2218 = vrot.slane %v498, %v2217
        %v2219 = vadd.f32 %v2214, %v2218
        %2220 = vst.msk [vmem:[#allocation2] sm:$0xff] %vm503, %v2219
        %p2221 = scmp.eq.s32.totalorder %s37, 1
        // Predicated region
        $region73: #{tpu_custom_call.1} parent=43 // pred_check
          %p2222 = pneg %p2221
        $region74: #{tpu_custom_call.1} parent=43 // pred_check_branch
          %2224 = sbr.rel (%p2222) target = $region76
        $region75: #{tpu_custom_call.1} parent=43 // pred_region
          %2225 = vst.msk [vmem:[%s469] sm:$0xff] %vm503, %v2219
        $region76: #{tpu_custom_call.1} parent=43 // pred_fallthru
          _
        %s2226 = sand.u32 %s208, 1
        %s2227 = scalar_lea.sflag [#allocation5], %s2226
        %s2228 = sand.u32 %s208, 1
        %s2229 = smul.addr %s2228, 8
        %s2230 = scalar_lea.vmem [#allocation14], %s2229
        // Predicated region
        $region77: #{tpu_custom_call.1} parent=43 // pred_check
          %p2231 = pneg %p218
        $region78: #{tpu_custom_call.1} parent=43 // pred_check_branch
          %2233 = sbr.rel (%p2231) target = $region80
        $region79: #{tpu_custom_call.1} parent=43 // pred_region
          %s2235 = ssub.s32 128, 128
          %2236 = vsyncadd %s2227, %s2235
          %s2237 = smul.addr %s36, 128
          %s2238 = scalar_lea.hbm %s6, %s2237
          %s2240 = sshll.u32 %s2230, 4
          %s2241 = int_to_ptr.vmem [resolvable:$true] %s2240
          %2243 = dma.vmem_to_hbm [thread:$0]  %s2241, 128, %s2238, %s2227
        $region80: #{tpu_custom_call.1} parent=43 // pred_fallthru
          _
      $region44: #{tpu_custom_call.1} parent=5 // pred_fallthru
        _
      %p2244 = scmp.le.s32.totalorder 2, %s27
      // Predicated region
      $region81: #{tpu_custom_call.1} parent=5 // pred_check
        %p2245 = pneg %p2244
      $region82: #{tpu_custom_call.1} parent=5 // pred_check_branch
        %2247 = sbr.rel (%p2245) target = $region84
      $region83: #{tpu_custom_call.1} parent=5 // pred_region
        %s2248 = ssub.s32 %s27, 2
        // Predicated region
        $region85: #{tpu_custom_call.1} parent=83 // pred_check
          %p2249 = pneg %p224
        $region86: #{tpu_custom_call.1} parent=83 // pred_check_branch
          %2251 = sbr.rel (%p2249) target = $region88
        $region87: #{tpu_custom_call.1} parent=83 // pred_region
          %s2252 = sand.u32 %s209, 1
          %s2253 = scalar_lea.sflag [#allocation5], %s2252
          %s2254 = sand.u32 %s209, 1
          %s2255 = smul.addr %s2254, 8
          %s2256 = scalar_lea.vmem [#allocation14], %s2255
          %2257 = dma.done %s2253, 128
        $region88: #{tpu_custom_call.1} parent=83 // pred_fallthru
          _
      $region84: #{tpu_custom_call.1} parent=5 // pred_fallthru
        _
    $region6: #{tpu_custom_call.1} parent=1 // loop_footer
      %s31 = sadd.s32 1, %s27
    $region7: #{tpu_custom_call.1} parent=1 // loop_footer_branch
      %26 = sbr.rel target = $region3
    $region8: #{tpu_custom_call.1} parent=1 // loop_exit
      _
    %2258 = vsyncpa [#allocation4], 1
    %s2259 = scalar_lea.sflag [#allocation4], 1
    %2260 = vsyncpa %s2259, 1
    %2261 = vsyncpa [#allocation7], 1
    %s2262 = scalar_lea.sflag [#allocation7], 1
    %2263 = vsyncpa %s2262, 1
    %2264 = vsyncpa [#allocation10], 1
    %s2265 = scalar_lea.sflag [#allocation10], 1
    %2266 = vsyncpa %s2265, 1
    %2267 = vsyncpa [#allocation13], 1
    %s2268 = scalar_lea.sflag [#allocation13], 1
    %2269 = vsyncpa %s2268, 1
    %2270 = vsyncpa [#allocation5], 1
    %s2271 = scalar_lea.sflag [#allocation5], 1
    %2272 = vsyncpa %s2271, 1

</llo_original>
